<compile_context>
chip_gen: v5e
topology: v5e:2x2
jax: 0.10.0
libtpu: 0.0.40
codegen_flags: <defaults>
</compile_context>

<pallas_src>
import functools

import jax
import jax.numpy as jnp
from jax.experimental import pallas as pl
from jax.experimental.pallas import tpu as pltpu

_LANE_PAD = 128  # zero halo on each side of the flattened H*W axis (>= W+1, lane-aligned)


def _dense_block_kernel(x_ref, w_ref, b_ref, o_ref, feat_ref, *,
                        H, W, c_in, growth, n_dense, compute_dtype):
    # x_ref:   (1, c_in, H*W)                 one image, channels-on-sublanes layout
    # w_ref:   (n_dense*9, growth, C_total)   per-(layer, tap) weights, zero-padded in C
    # b_ref:   (n_dense, growth, 1)
    # o_ref:   (1, C_total, H*W)
    # feat_ref:(C_total, H*W + 2*_LANE_PAD)   VMEM-resident growing feature map + halo
    HW = H * W

    # Zero the scratch once (provides the zero halo and zero not-yet-written channels),
    # then drop this image's input channels into the valid lane window.
    feat_ref[...] = jnp.zeros_like(feat_ref)
    feat_ref[pl.ds(0, c_in), pl.ds(_LANE_PAD, HW)] = x_ref[0]

    # Row-wrap masks, computed once and reused for every layer: a lane shift of +-1 wraps
    # across image rows, so those destination columns must be zeroed.
    lane = jax.lax.broadcasted_iota(jnp.int32, (1, HW), 1)
    col = lane % W
    mask_left = col >= 1          # tap dx==0 (offset -1): source col -1 at col==0
    mask_right = col <= (W - 2)   # tap dx==2 (offset +1): source col  W at col==W-1

    for l in range(n_dense):
        # Start the accumulator from the bias (broadcast over lanes), accumulate in f32.
        acc = jnp.broadcast_to(b_ref[l], (growth, HW))
        for dy in range(3):
            for dx in range(3):
                shift = (dy - 1) * W + (dx - 1)
                # Static lane slice of the halo'd scratch implements the spatial shift;
                # vertical out-of-bounds taps land in the zero halo automatically.
                shifted = feat_ref[:, pl.ds(_LANE_PAD + shift, HW)]
                if dx == 0:
                    shifted = jnp.where(mask_left, shifted, 0.0)
                elif dx == 2:
                    shifted = jnp.where(mask_right, shifted, 0.0)
                acc += jnp.dot(
                    w_ref[l * 9 + dy * 3 + dx],              # (growth, C_total)
                    shifted.astype(compute_dtype),           # (C_total, HW) lane-dense
                    preferred_element_type=jnp.float32)
        out_l = jnp.maximum(acc, 0.0)                        # ReLU (bias already in acc)
        feat_ref[pl.ds(c_in + l * growth, growth), pl.ds(_LANE_PAD, HW)] = out_l

    # Final concatenated feature map: one lane-dense (C_total, 256) store per image.
    o_ref[0] = feat_ref[:, pl.ds(_LANE_PAD, HW)]


def single_block_pallas(x_nchw, params, *, compute_dtype=jnp.float32):
    """Fused SingleBlock forward.  x_nchw: (B, Cin, H, W) float32 (PyTorch layout)."""
    B, c_in, H, W = x_nchw.shape
    n_dense = len(params)
    growth = params[0][0].shape[0]
    c_total = c_in + n_dense * growth
    HW = H * W

    # Pack all layers' weights into one (n_dense*9, growth, C_total) array, zero-padded
    # along the input-channel axis (channels a layer cannot yet see are zero in the
    # scratch, so the padded columns contribute nothing).
    w_packed = jnp.zeros((n_dense * 9, growth, c_total), jnp.float32)
    b_packed = jnp.zeros((n_dense, growth, 1), jnp.float32)
    for l, (w, b) in enumerate(params):        # w: (growth, Cin_l, 3, 3) OIHW, b: (growth,)
        cin_l = w.shape[1]
        for dy in range(3):
            for dx in range(3):
                w_packed = w_packed.at[l * 9 + dy * 3 + dx, :, :cin_l].set(w[:, :, dy, dx])
        b_packed = b_packed.at[l, :, 0].set(b)
    w_packed = w_packed.astype(compute_dtype)  # MXU operand dtype; accumulation stays f32

    x_flat = x_nchw.reshape(B, c_in, HW)       # NCHW -> channels-on-sublanes, HW on lanes

    kernel = functools.partial(
        _dense_block_kernel, H=H, W=W, c_in=c_in, growth=growth,
        n_dense=n_dense, compute_dtype=compute_dtype)

    out = pl.pallas_call(
        kernel,
        out_shape=jax.ShapeDtypeStruct((B, c_total, HW), jnp.float32),
        grid=(B,),
        in_specs=[
            pl.BlockSpec((1, c_in, HW), lambda i: (i, 0, 0)),
            # Constant index_maps: weights/biases are DMA'd once and stay VMEM-resident.
            pl.BlockSpec((n_dense * 9, growth, c_total), lambda i: (0, 0, 0)),
            pl.BlockSpec((n_dense, growth, 1), lambda i: (0, 0, 0)),
        ],
        out_specs=pl.BlockSpec((1, c_total, HW), lambda i: (i, 0, 0)),
        scratch_shapes=[pltpu.VMEM((c_total, HW + 2 * _LANE_PAD), jnp.float32)],
        compiler_params=pltpu.CompilerParams(dimension_semantics=("parallel",)),
    )(x_flat, w_packed, b_packed)

    return out.reshape(B, c_total, H, W)       # back to PyTorch NCHW


def init_params(key, in_channels, growth_rate, n_dense):
    """Deterministic PyTorch-Conv2d-style init: U(-1/sqrt(fan_in), 1/sqrt(fan_in)), OIHW."""
    params = []
    c = in_channels
    for _ in range(n_dense):
        key, kw, kb = jax.random.split(key, 3)
        bound = 1.0 / ((c * 9) ** 0.5)
        w = jax.random.uniform(kw, (growth_rate, c, 3, 3), jnp.float32, -bound, bound)
        b = jax.random.uniform(kb, (growth_rate,), jnp.float32, -bound, bound)
        params.append((w, b))
        c += growth_rate
    return params


def single_block_reference(x_nchw, params):
    out = x_nchw
    for w, b in params:
        conv = jax.lax.conv_general_dilated(
            out, w, window_strides=(1, 1), padding=((1, 1), (1, 1)),
            dimension_numbers=("NCHW", "OIHW", "NCHW"))
        conv = jnp.maximum(conv + b[None, :, None, None], 0.0)
        out = jnp.concatenate([out, conv], axis=1)
    return out


if __name__ == "__main__":
    B, C, H, W = 2, 4, 16, 16
    growth_rate, n_dense = 4, 3

    key = jax.random.PRNGKey(0)
    key, kx = jax.random.split(key)
    x = jax.random.normal(kx, (B, C, H, W), jnp.float32)     # PyTorch NCHW layout
    params = init_params(key, C, growth_rate, n_dense)

    out = single_block_pallas(x, params)                     # f32 matmuls
    jax.block_until_ready(out)

    ref = single_block_reference(x, params)
    assert out.shape == (B, C + growth_rate * n_dense, H, W)
    assert jnp.allclose(out, ref, atol=1e-4, rtol=1e-4)

    # bf16 MXU operands with f32 accumulation (the compute lever at realistic sizes).
    out_bf16 = single_block_pallas(x, params, compute_dtype=jnp.bfloat16)
    jax.block_until_ready(out_bf16)
    assert jnp.allclose(out_bf16, ref, atol=5e-2, rtol=5e-2)

    print("KERNEL_OK")
</pallas_src>

<mosaic_0001>
module attributes {stable_mosaic.version = 11 : i64} {
  func.func @_dense_block_kernel(%arg0: i32, %arg1: memref<1x4x256xf32, #tpu.memory_space<vmem>>, %arg2: memref<27x4x16xf32, #tpu.memory_space<vmem>>, %arg3: memref<3x4x1xf32, #tpu.memory_space<vmem>>, %arg4: memref<1x16x256xf32, #tpu.memory_space<vmem>>, %arg5: memref<16x512xf32, #tpu.memory_space<vmem>>) attributes {dimension_semantics = [#tpu.dimension_semantics<parallel>], iteration_bounds = array<i64: 2>, scalar_prefetch = 0 : i64, scratch_operands = 1 : i64, tpu.core_type = #tpu.core_type<tc>, window_params = [{transform_indices = @transform_0, window_bounds = array<i64: 1, 4, 256>}, {pipeline_mode = #tpu.pipeline_mode<synchronous>, transform_indices = @transform_1, window_bounds = array<i64: 27, 4, 16>}, {pipeline_mode = #tpu.pipeline_mode<synchronous>, transform_indices = @transform_2, window_bounds = array<i64: 3, 4, 1>}, {transform_indices = @transform_3, window_bounds = array<i64: 1, 16, 256>}]} {
    %cst = arith.constant 0.000000e+00 : f32
    %0 = vector.broadcast %cst : f32 to vector<16x512xf32>
    %c0 = arith.constant 0 : index
    %c0_0 = arith.constant 0 : index
    %1 = vector.load %arg5[%c0, %c0_0] : memref<16x512xf32, #tpu.memory_space<vmem>>, vector<16x512xf32>
    tpu.vector_store %arg5[%c0, %c0_0], %0 {strides = array<i32>} : memref<16x512xf32, #tpu.memory_space<vmem>>, vector<16x512xf32>,
    %c0_1 = arith.constant 0 : index
    %c0_2 = arith.constant 0 : index
    %c0_3 = arith.constant 0 : index
    %2 = vector.load %arg1[%c0_1, %c0_2, %c0_3] : memref<1x4x256xf32, #tpu.memory_space<vmem>>, vector<1x4x256xf32>
    %3 = vector.shape_cast %2 : vector<1x4x256xf32> to vector<4x256xf32>
    %c0_4 = arith.constant 0 : index
    %c128 = arith.constant 128 : index
    %4 = vector.load %arg5[%c0_4, %c128] : memref<16x512xf32, #tpu.memory_space<vmem>>, vector<4x256xf32>
    tpu.vector_store %arg5[%c0_4, %c128], %3 {strides = array<i32>} : memref<16x512xf32, #tpu.memory_space<vmem>>, vector<4x256xf32>,
    %5 = tpu.iota {dimensions = array<i32: 1>} : vector<1x256xi32>
    %c16_i32 = arith.constant 16 : i32
    %c0_i32 = arith.constant 0 : i32
    %6 = arith.cmpi eq, %c16_i32, %c0_i32 : i32
    %c1_i32 = arith.constant 1 : i32
    %7 = arith.select %6, %c1_i32, %c16_i32 : i32
    %8 = vector.broadcast %7 : i32 to vector<1x256xi32>
    %9 = arith.remsi %5, %8 : vector<1x256xi32>
    %c0_i32_5 = arith.constant 0 : i32
    %10 = vector.broadcast %c0_i32_5 : i32 to vector<1x256xi32>
    %11 = arith.cmpi ne, %9, %10 : vector<1x256xi32>
    %c0_i32_6 = arith.constant 0 : i32
    %12 = vector.broadcast %c0_i32_6 : i32 to vector<1x256xi32>
    %13 = arith.cmpi slt, %9, %12 : vector<1x256xi32>
    %c0_i32_7 = arith.constant 0 : i32
    %14 = arith.cmpi slt, %7, %c0_i32_7 : i32
    %15 = vector.broadcast %14 : i1 to vector<1x256xi1>
    %16 = vector.broadcast %15 : vector<1x256xi1> to vector<1x256xi1>
    %17 = arith.xori %13, %16 : vector<1x256xi1>
    %18 = arith.andi %17, %11 : vector<1x256xi1>
    %19 = vector.broadcast %7 : i32 to vector<1x256xi32>
    %20 = arith.addi %9, %19 : vector<1x256xi32>
    %21 = arith.select %18, %20, %9 : vector<1x256xi1>, vector<1x256xi32>
    %c1_i32_8 = arith.constant 1 : i32
    %22 = vector.broadcast %c1_i32_8 : i32 to vector<1x256xi32>
    %23 = arith.cmpi sge, %21, %22 : vector<1x256xi32>
    %c14_i32 = arith.constant 14 : i32
    %24 = vector.broadcast %c14_i32 : i32 to vector<1x256xi32>
    %25 = arith.cmpi sle, %21, %24 : vector<1x256xi32>
    %c0_9 = arith.constant 0 : index
    %c0_10 = arith.constant 0 : index
    %c0_11 = arith.constant 0 : index
    %26 = vector.load %arg3[%c0_9, %c0_10, %c0_11] : memref<3x4x1xf32, #tpu.memory_space<vmem>>, vector<1x4x1xf32>
    %27 = vector.shape_cast %26 : vector<1x4x1xf32> to vector<4x1xf32>
    %28 = vector.shape_cast %27 : vector<4x1xf32> to vector<4x1xf32>
    %29 = vector.broadcast %28 : vector<4x1xf32> to vector<4x256xf32>
    %c0_12 = arith.constant 0 : index
    %c111 = arith.constant 111 : index
    %30 = vector.load %arg5[%c0_12, %c111] : memref<16x512xf32, #tpu.memory_space<vmem>>, vector<16x256xf32>
    %cst_13 = arith.constant 0.000000e+00 : f32
    %31 = vector.shape_cast %23 : vector<1x256xi1> to vector<1x256xi1>
    %32 = vector.broadcast %31 : vector<1x256xi1> to vector<16x256xi1>
    %33 = vector.broadcast %cst_13 : f32 to vector<16x256xf32>
    %34 = arith.select %32, %30, %33 : vector<16x256xi1>, vector<16x256xf32>
    %c0_14 = arith.constant 0 : index
    %c0_15 = arith.constant 0 : index
    %c0_16 = arith.constant 0 : index
    %35 = vector.load %arg2[%c0_14, %c0_15, %c0_16] : memref<27x4x16xf32, #tpu.memory_space<vmem>>, vector<1x4x16xf32>
    %36 = vector.shape_cast %35 : vector<1x4x16xf32> to vector<4x16xf32>
    %cst_17 = arith.constant dense<0.000000e+00> : vector<4x256xf32>
    %37 = tpu.matmul %36, %34, %cst_17 {dimension_numbers = #tpu.dot_dimension_numbers<[1], [0], [0], [1], [0, 0, 1, 1], [], []>} : vector<4x16xf32>, vector<16x256xf32>, vector<4x256xf32> -> vector<4x256xf32>
    %38 = arith.addf %29, %37 : vector<4x256xf32>
    %c0_18 = arith.constant 0 : index
    %c112 = arith.constant 112 : index
    %39 = vector.load %arg5[%c0_18, %c112] : memref<16x512xf32, #tpu.memory_space<vmem>>, vector<16x256xf32>
    %c1 = arith.constant 1 : index
    %c0_19 = arith.constant 0 : index
    %c0_20 = arith.constant 0 : index
    %40 = vector.load %arg2[%c1, %c0_19, %c0_20] : memref<27x4x16xf32, #tpu.memory_space<vmem>>, vector<1x4x16xf32>
    %41 = vector.shape_cast %40 : vector<1x4x16xf32> to vector<4x16xf32>
    %cst_21 = arith.constant dense<0.000000e+00> : vector<4x256xf32>
    %42 = tpu.matmul %41, %39, %cst_21 {dimension_numbers = #tpu.dot_dimension_numbers<[1], [0], [0], [1], [0, 0, 1, 1], [], []>} : vector<4x16xf32>, vector<16x256xf32>, vector<4x256xf32> -> vector<4x256xf32>
    %43 = arith.addf %38, %42 : vector<4x256xf32>
    %c0_22 = arith.constant 0 : index
    %c113 = arith.constant 113 : index
    %44 = vector.load %arg5[%c0_22, %c113] : memref<16x512xf32, #tpu.memory_space<vmem>>, vector<16x256xf32>
    %cst_23 = arith.constant 0.000000e+00 : f32
    %45 = vector.shape_cast %25 : vector<1x256xi1> to vector<1x256xi1>
    %46 = vector.broadcast %45 : vector<1x256xi1> to vector<16x256xi1>
    %47 = vector.broadcast %cst_23 : f32 to vector<16x256xf32>
    %48 = arith.select %46, %44, %47 : vector<16x256xi1>, vector<16x256xf32>
    %c2 = arith.constant 2 : index
    %c0_24 = arith.constant 0 : index
    %c0_25 = arith.constant 0 : index
    %49 = vector.load %arg2[%c2, %c0_24, %c0_25] : memref<27x4x16xf32, #tpu.memory_space<vmem>>, vector<1x4x16xf32>
    %50 = vector.shape_cast %49 : vector<1x4x16xf32> to vector<4x16xf32>
    %cst_26 = arith.constant dense<0.000000e+00> : vector<4x256xf32>
    %51 = tpu.matmul %50, %48, %cst_26 {dimension_numbers = #tpu.dot_dimension_numbers<[1], [0], [0], [1], [0, 0, 1, 1], [], []>} : vector<4x16xf32>, vector<16x256xf32>, vector<4x256xf32> -> vector<4x256xf32>
    %52 = arith.addf %43, %51 : vector<4x256xf32>
    %c0_27 = arith.constant 0 : index
    %c127 = arith.constant 127 : index
    %53 = vector.load %arg5[%c0_27, %c127] : memref<16x512xf32, #tpu.memory_space<vmem>>, vector<16x256xf32>
    %cst_28 = arith.constant 0.000000e+00 : f32
    %54 = vector.shape_cast %23 : vector<1x256xi1> to vector<1x256xi1>
    %55 = vector.broadcast %54 : vector<1x256xi1> to vector<16x256xi1>
    %56 = vector.broadcast %cst_28 : f32 to vector<16x256xf32>
    %57 = arith.select %55, %53, %56 : vector<16x256xi1>, vector<16x256xf32>
    %c3 = arith.constant 3 : index
    %c0_29 = arith.constant 0 : index
    %c0_30 = arith.constant 0 : index
    %58 = vector.load %arg2[%c3, %c0_29, %c0_30] : memref<27x4x16xf32, #tpu.memory_space<vmem>>, vector<1x4x16xf32>
    %59 = vector.shape_cast %58 : vector<1x4x16xf32> to vector<4x16xf32>
    %cst_31 = arith.constant dense<0.000000e+00> : vector<4x256xf32>
    %60 = tpu.matmul %59, %57, %cst_31 {dimension_numbers = #tpu.dot_dimension_numbers<[1], [0], [0], [1], [0, 0, 1, 1], [], []>} : vector<4x16xf32>, vector<16x256xf32>, vector<4x256xf32> -> vector<4x256xf32>
    %61 = arith.addf %52, %60 : vector<4x256xf32>
    %c0_32 = arith.constant 0 : index
    %c128_33 = arith.constant 128 : index
    %62 = vector.load %arg5[%c0_32, %c128_33] : memref<16x512xf32, #tpu.memory_space<vmem>>, vector<16x256xf32>
    %c4 = arith.constant 4 : index
    %c0_34 = arith.constant 0 : index
    %c0_35 = arith.constant 0 : index
    %63 = vector.load %arg2[%c4, %c0_34, %c0_35] : memref<27x4x16xf32, #tpu.memory_space<vmem>>, vector<1x4x16xf32>
    %64 = vector.shape_cast %63 : vector<1x4x16xf32> to vector<4x16xf32>
    %cst_36 = arith.constant dense<0.000000e+00> : vector<4x256xf32>
    %65 = tpu.matmul %64, %62, %cst_36 {dimension_numbers = #tpu.dot_dimension_numbers<[1], [0], [0], [1], [0, 0, 1, 1], [], []>} : vector<4x16xf32>, vector<16x256xf32>, vector<4x256xf32> -> vector<4x256xf32>
    %66 = arith.addf %61, %65 : vector<4x256xf32>
    %c0_37 = arith.constant 0 : index
    %c129 = arith.constant 129 : index
    %67 = vector.load %arg5[%c0_37, %c129] : memref<16x512xf32, #tpu.memory_space<vmem>>, vector<16x256xf32>
    %cst_38 = arith.constant 0.000000e+00 : f32
    %68 = vector.shape_cast %25 : vector<1x256xi1> to vector<1x256xi1>
    %69 = vector.broadcast %68 : vector<1x256xi1> to vector<16x256xi1>
    %70 = vector.broadcast %cst_38 : f32 to vector<16x256xf32>
    %71 = arith.select %69, %67, %70 : vector<16x256xi1>, vector<16x256xf32>
    %c5 = arith.constant 5 : index
    %c0_39 = arith.constant 0 : index
    %c0_40 = arith.constant 0 : index
    %72 = vector.load %arg2[%c5, %c0_39, %c0_40] : memref<27x4x16xf32, #tpu.memory_space<vmem>>, vector<1x4x16xf32>
    %73 = vector.shape_cast %72 : vector<1x4x16xf32> to vector<4x16xf32>
    %cst_41 = arith.constant dense<0.000000e+00> : vector<4x256xf32>
    %74 = tpu.matmul %73, %71, %cst_41 {dimension_numbers = #tpu.dot_dimension_numbers<[1], [0], [0], [1], [0, 0, 1, 1], [], []>} : vector<4x16xf32>, vector<16x256xf32>, vector<4x256xf32> -> vector<4x256xf32>
    %75 = arith.addf %66, %74 : vector<4x256xf32>
    %c0_42 = arith.constant 0 : index
    %c143 = arith.constant 143 : index
    %76 = vector.load %arg5[%c0_42, %c143] : memref<16x512xf32, #tpu.memory_space<vmem>>, vector<16x256xf32>
    %cst_43 = arith.constant 0.000000e+00 : f32
    %77 = vector.shape_cast %23 : vector<1x256xi1> to vector<1x256xi1>
    %78 = vector.broadcast %77 : vector<1x256xi1> to vector<16x256xi1>
    %79 = vector.broadcast %cst_43 : f32 to vector<16x256xf32>
    %80 = arith.select %78, %76, %79 : vector<16x256xi1>, vector<16x256xf32>
    %c6 = arith.constant 6 : index
    %c0_44 = arith.constant 0 : index
    %c0_45 = arith.constant 0 : index
    %81 = vector.load %arg2[%c6, %c0_44, %c0_45] : memref<27x4x16xf32, #tpu.memory_space<vmem>>, vector<1x4x16xf32>
    %82 = vector.shape_cast %81 : vector<1x4x16xf32> to vector<4x16xf32>
    %cst_46 = arith.constant dense<0.000000e+00> : vector<4x256xf32>
    %83 = tpu.matmul %82, %80, %cst_46 {dimension_numbers = #tpu.dot_dimension_numbers<[1], [0], [0], [1], [0, 0, 1, 1], [], []>} : vector<4x16xf32>, vector<16x256xf32>, vector<4x256xf32> -> vector<4x256xf32>
    %84 = arith.addf %75, %83 : vector<4x256xf32>
    %c0_47 = arith.constant 0 : index
    %c144 = arith.constant 144 : index
    %85 = vector.load %arg5[%c0_47, %c144] : memref<16x512xf32, #tpu.memory_space<vmem>>, vector<16x256xf32>
    %c7 = arith.constant 7 : index
    %c0_48 = arith.constant 0 : index
    %c0_49 = arith.constant 0 : index
    %86 = vector.load %arg2[%c7, %c0_48, %c0_49] : memref<27x4x16xf32, #tpu.memory_space<vmem>>, vector<1x4x16xf32>
    %87 = vector.shape_cast %86 : vector<1x4x16xf32> to vector<4x16xf32>
    %cst_50 = arith.constant dense<0.000000e+00> : vector<4x256xf32>
    %88 = tpu.matmul %87, %85, %cst_50 {dimension_numbers = #tpu.dot_dimension_numbers<[1], [0], [0], [1], [0, 0, 1, 1], [], []>} : vector<4x16xf32>, vector<16x256xf32>, vector<4x256xf32> -> vector<4x256xf32>
    %89 = arith.addf %84, %88 : vector<4x256xf32>
    %c0_51 = arith.constant 0 : index
    %c145 = arith.constant 145 : index
    %90 = vector.load %arg5[%c0_51, %c145] : memref<16x512xf32, #tpu.memory_space<vmem>>, vector<16x256xf32>
    %cst_52 = arith.constant 0.000000e+00 : f32
    %91 = vector.shape_cast %25 : vector<1x256xi1> to vector<1x256xi1>
    %92 = vector.broadcast %91 : vector<1x256xi1> to vector<16x256xi1>
    %93 = vector.broadcast %cst_52 : f32 to vector<16x256xf32>
    %94 = arith.select %92, %90, %93 : vector<16x256xi1>, vector<16x256xf32>
    %c8 = arith.constant 8 : index
    %c0_53 = arith.constant 0 : index
    %c0_54 = arith.constant 0 : index
    %95 = vector.load %arg2[%c8, %c0_53, %c0_54] : memref<27x4x16xf32, #tpu.memory_space<vmem>>, vector<1x4x16xf32>
    %96 = vector.shape_cast %95 : vector<1x4x16xf32> to vector<4x16xf32>
    %cst_55 = arith.constant dense<0.000000e+00> : vector<4x256xf32>
    %97 = tpu.matmul %96, %94, %cst_55 {dimension_numbers = #tpu.dot_dimension_numbers<[1], [0], [0], [1], [0, 0, 1, 1], [], []>} : vector<4x16xf32>, vector<16x256xf32>, vector<4x256xf32> -> vector<4x256xf32>
    %98 = arith.addf %89, %97 : vector<4x256xf32>
    %cst_56 = arith.constant 0.000000e+00 : f32
    %99 = vector.broadcast %cst_56 : f32 to vector<4x256xf32>
    %100 = arith.maximumf %98, %99 : vector<4x256xf32>
    %c4_57 = arith.constant 4 : index
    %c128_58 = arith.constant 128 : index
    %101 = vector.load %arg5[%c4_57, %c128_58] : memref<16x512xf32, #tpu.memory_space<vmem>>, vector<4x256xf32>
    tpu.vector_store %arg5[%c4_57, %c128_58], %100 {strides = array<i32>} : memref<16x512xf32, #tpu.memory_space<vmem>>, vector<4x256xf32>,
    %c1_59 = arith.constant 1 : index
    %c0_60 = arith.constant 0 : index
    %c0_61 = arith.constant 0 : index
    %102 = vector.load %arg3[%c1_59, %c0_60, %c0_61] : memref<3x4x1xf32, #tpu.memory_space<vmem>>, vector<1x4x1xf32>
    %103 = vector.shape_cast %102 : vector<1x4x1xf32> to vector<4x1xf32>
    %104 = vector.shape_cast %103 : vector<4x1xf32> to vector<4x1xf32>
    %105 = vector.broadcast %104 : vector<4x1xf32> to vector<4x256xf32>
    %c0_62 = arith.constant 0 : index
    %c111_63 = arith.constant 111 : index
    %106 = vector.load %arg5[%c0_62, %c111_63] : memref<16x512xf32, #tpu.memory_space<vmem>>, vector<16x256xf32>
    %cst_64 = arith.constant 0.000000e+00 : f32
    %107 = vector.shape_cast %23 : vector<1x256xi1> to vector<1x256xi1>
    %108 = vector.broadcast %107 : vector<1x256xi1> to vector<16x256xi1>
    %109 = vector.broadcast %cst_64 : f32 to vector<16x256xf32>
    %110 = arith.select %108, %106, %109 : vector<16x256xi1>, vector<16x256xf32>
    %c9 = arith.constant 9 : index
    %c0_65 = arith.constant 0 : index
    %c0_66 = arith.constant 0 : index
    %111 = vector.load %arg2[%c9, %c0_65, %c0_66] : memref<27x4x16xf32, #tpu.memory_space<vmem>>, vector<1x4x16xf32>
    %112 = vector.shape_cast %111 : vector<1x4x16xf32> to vector<4x16xf32>
    %cst_67 = arith.constant dense<0.000000e+00> : vector<4x256xf32>
    %113 = tpu.matmul %112, %110, %cst_67 {dimension_numbers = #tpu.dot_dimension_numbers<[1], [0], [0], [1], [0, 0, 1, 1], [], []>} : vector<4x16xf32>, vector<16x256xf32>, vector<4x256xf32> -> vector<4x256xf32>
    %114 = arith.addf %105, %113 : vector<4x256xf32>
    %c0_68 = arith.constant 0 : index
    %c112_69 = arith.constant 112 : index
    %115 = vector.load %arg5[%c0_68, %c112_69] : memref<16x512xf32, #tpu.memory_space<vmem>>, vector<16x256xf32>
    %c10 = arith.constant 10 : index
    %c0_70 = arith.constant 0 : index
    %c0_71 = arith.constant 0 : index
    %116 = vector.load %arg2[%c10, %c0_70, %c0_71] : memref<27x4x16xf32, #tpu.memory_space<vmem>>, vector<1x4x16xf32>
    %117 = vector.shape_cast %116 : vector<1x4x16xf32> to vector<4x16xf32>
    %cst_72 = arith.constant dense<0.000000e+00> : vector<4x256xf32>
    %118 = tpu.matmul %117, %115, %cst_72 {dimension_numbers = #tpu.dot_dimension_numbers<[1], [0], [0], [1], [0, 0, 1, 1], [], []>} : vector<4x16xf32>, vector<16x256xf32>, vector<4x256xf32> -> vector<4x256xf32>
    %119 = arith.addf %114, %118 : vector<4x256xf32>
    %c0_73 = arith.constant 0 : index
    %c113_74 = arith.constant 113 : index
    %120 = vector.load %arg5[%c0_73, %c113_74] : memref<16x512xf32, #tpu.memory_space<vmem>>, vector<16x256xf32>
    %cst_75 = arith.constant 0.000000e+00 : f32
    %121 = vector.shape_cast %25 : vector<1x256xi1> to vector<1x256xi1>
    %122 = vector.broadcast %121 : vector<1x256xi1> to vector<16x256xi1>
    %123 = vector.broadcast %cst_75 : f32 to vector<16x256xf32>
    %124 = arith.select %122, %120, %123 : vector<16x256xi1>, vector<16x256xf32>
    %c11 = arith.constant 11 : index
    %c0_76 = arith.constant 0 : index
    %c0_77 = arith.constant 0 : index
    %125 = vector.load %arg2[%c11, %c0_76, %c0_77] : memref<27x4x16xf32, #tpu.memory_space<vmem>>, vector<1x4x16xf32>
    %126 = vector.shape_cast %125 : vector<1x4x16xf32> to vector<4x16xf32>
    %cst_78 = arith.constant dense<0.000000e+00> : vector<4x256xf32>
    %127 = tpu.matmul %126, %124, %cst_78 {dimension_numbers = #tpu.dot_dimension_numbers<[1], [0], [0], [1], [0, 0, 1, 1], [], []>} : vector<4x16xf32>, vector<16x256xf32>, vector<4x256xf32> -> vector<4x256xf32>
    %128 = arith.addf %119, %127 : vector<4x256xf32>
    %c0_79 = arith.constant 0 : index
    %c127_80 = arith.constant 127 : index
    %129 = vector.load %arg5[%c0_79, %c127_80] : memref<16x512xf32, #tpu.memory_space<vmem>>, vector<16x256xf32>
    %cst_81 = arith.constant 0.000000e+00 : f32
    %130 = vector.shape_cast %23 : vector<1x256xi1> to vector<1x256xi1>
    %131 = vector.broadcast %130 : vector<1x256xi1> to vector<16x256xi1>
    %132 = vector.broadcast %cst_81 : f32 to vector<16x256xf32>
    %133 = arith.select %131, %129, %132 : vector<16x256xi1>, vector<16x256xf32>
    %c12 = arith.constant 12 : index
    %c0_82 = arith.constant 0 : index
    %c0_83 = arith.constant 0 : index
    %134 = vector.load %arg2[%c12, %c0_82, %c0_83] : memref<27x4x16xf32, #tpu.memory_space<vmem>>, vector<1x4x16xf32>
    %135 = vector.shape_cast %134 : vector<1x4x16xf32> to vector<4x16xf32>
    %cst_84 = arith.constant dense<0.000000e+00> : vector<4x256xf32>
    %136 = tpu.matmul %135, %133, %cst_84 {dimension_numbers = #tpu.dot_dimension_numbers<[1], [0], [0], [1], [0, 0, 1, 1], [], []>} : vector<4x16xf32>, vector<16x256xf32>, vector<4x256xf32> -> vector<4x256xf32>
    %137 = arith.addf %128, %136 : vector<4x256xf32>
    %c0_85 = arith.constant 0 : index
    %c128_86 = arith.constant 128 : index
    %138 = vector.load %arg5[%c0_85, %c128_86] : memref<16x512xf32, #tpu.memory_space<vmem>>, vector<16x256xf32>
    %c13 = arith.constant 13 : index
    %c0_87 = arith.constant 0 : index
    %c0_88 = arith.constant 0 : index
    %139 = vector.load %arg2[%c13, %c0_87, %c0_88] : memref<27x4x16xf32, #tpu.memory_space<vmem>>, vector<1x4x16xf32>
    %140 = vector.shape_cast %139 : vector<1x4x16xf32> to vector<4x16xf32>
    %cst_89 = arith.constant dense<0.000000e+00> : vector<4x256xf32>
    %141 = tpu.matmul %140, %138, %cst_89 {dimension_numbers = #tpu.dot_dimension_numbers<[1], [0], [0], [1], [0, 0, 1, 1], [], []>} : vector<4x16xf32>, vector<16x256xf32>, vector<4x256xf32> -> vector<4x256xf32>
    %142 = arith.addf %137, %141 : vector<4x256xf32>
    %c0_90 = arith.constant 0 : index
    %c129_91 = arith.constant 129 : index
    %143 = vector.load %arg5[%c0_90, %c129_91] : memref<16x512xf32, #tpu.memory_space<vmem>>, vector<16x256xf32>
    %cst_92 = arith.constant 0.000000e+00 : f32
    %144 = vector.shape_cast %25 : vector<1x256xi1> to vector<1x256xi1>
    %145 = vector.broadcast %144 : vector<1x256xi1> to vector<16x256xi1>
    %146 = vector.broadcast %cst_92 : f32 to vector<16x256xf32>
    %147 = arith.select %145, %143, %146 : vector<16x256xi1>, vector<16x256xf32>
    %c14 = arith.constant 14 : index
    %c0_93 = arith.constant 0 : index
    %c0_94 = arith.constant 0 : index
    %148 = vector.load %arg2[%c14, %c0_93, %c0_94] : memref<27x4x16xf32, #tpu.memory_space<vmem>>, vector<1x4x16xf32>
    %149 = vector.shape_cast %148 : vector<1x4x16xf32> to vector<4x16xf32>
    %cst_95 = arith.constant dense<0.000000e+00> : vector<4x256xf32>
    %150 = tpu.matmul %149, %147, %cst_95 {dimension_numbers = #tpu.dot_dimension_numbers<[1], [0], [0], [1], [0, 0, 1, 1], [], []>} : vector<4x16xf32>, vector<16x256xf32>, vector<4x256xf32> -> vector<4x256xf32>
    %151 = arith.addf %142, %150 : vector<4x256xf32>
    %c0_96 = arith.constant 0 : index
    %c143_97 = arith.constant 143 : index
    %152 = vector.load %arg5[%c0_96, %c143_97] : memref<16x512xf32, #tpu.memory_space<vmem>>, vector<16x256xf32>
    %cst_98 = arith.constant 0.000000e+00 : f32
    %153 = vector.shape_cast %23 : vector<1x256xi1> to vector<1x256xi1>
    %154 = vector.broadcast %153 : vector<1x256xi1> to vector<16x256xi1>
    %155 = vector.broadcast %cst_98 : f32 to vector<16x256xf32>
    %156 = arith.select %154, %152, %155 : vector<16x256xi1>, vector<16x256xf32>
    %c15 = arith.constant 15 : index
    %c0_99 = arith.constant 0 : index
    %c0_100 = arith.constant 0 : index
    %157 = vector.load %arg2[%c15, %c0_99, %c0_100] : memref<27x4x16xf32, #tpu.memory_space<vmem>>, vector<1x4x16xf32>
    %158 = vector.shape_cast %157 : vector<1x4x16xf32> to vector<4x16xf32>
    %cst_101 = arith.constant dense<0.000000e+00> : vector<4x256xf32>
    %159 = tpu.matmul %158, %156, %cst_101 {dimension_numbers = #tpu.dot_dimension_numbers<[1], [0], [0], [1], [0, 0, 1, 1], [], []>} : vector<4x16xf32>, vector<16x256xf32>, vector<4x256xf32> -> vector<4x256xf32>
    %160 = arith.addf %151, %159 : vector<4x256xf32>
    %c0_102 = arith.constant 0 : index
    %c144_103 = arith.constant 144 : index
    %161 = vector.load %arg5[%c0_102, %c144_103] : memref<16x512xf32, #tpu.memory_space<vmem>>, vector<16x256xf32>
    %c16 = arith.constant 16 : index
    %c0_104 = arith.constant 0 : index
    %c0_105 = arith.constant 0 : index
    %162 = vector.load %arg2[%c16, %c0_104, %c0_105] : memref<27x4x16xf32, #tpu.memory_space<vmem>>, vector<1x4x16xf32>
    %163 = vector.shape_cast %162 : vector<1x4x16xf32> to vector<4x16xf32>
    %cst_106 = arith.constant dense<0.000000e+00> : vector<4x256xf32>
    %164 = tpu.matmul %163, %161, %cst_106 {dimension_numbers = #tpu.dot_dimension_numbers<[1], [0], [0], [1], [0, 0, 1, 1], [], []>} : vector<4x16xf32>, vector<16x256xf32>, vector<4x256xf32> -> vector<4x256xf32>
    %165 = arith.addf %160, %164 : vector<4x256xf32>
    %c0_107 = arith.constant 0 : index
    %c145_108 = arith.constant 145 : index
    %166 = vector.load %arg5[%c0_107, %c145_108] : memref<16x512xf32, #tpu.memory_space<vmem>>, vector<16x256xf32>
    %cst_109 = arith.constant 0.000000e+00 : f32
    %167 = vector.shape_cast %25 : vector<1x256xi1> to vector<1x256xi1>
    %168 = vector.broadcast %167 : vector<1x256xi1> to vector<16x256xi1>
    %169 = vector.broadcast %cst_109 : f32 to vector<16x256xf32>
    %170 = arith.select %168, %166, %169 : vector<16x256xi1>, vector<16x256xf32>
    %c17 = arith.constant 17 : index
    %c0_110 = arith.constant 0 : index
    %c0_111 = arith.constant 0 : index
    %171 = vector.load %arg2[%c17, %c0_110, %c0_111] : memref<27x4x16xf32, #tpu.memory_space<vmem>>, vector<1x4x16xf32>
    %172 = vector.shape_cast %171 : vector<1x4x16xf32> to vector<4x16xf32>
    %cst_112 = arith.constant dense<0.000000e+00> : vector<4x256xf32>
    %173 = tpu.matmul %172, %170, %cst_112 {dimension_numbers = #tpu.dot_dimension_numbers<[1], [0], [0], [1], [0, 0, 1, 1], [], []>} : vector<4x16xf32>, vector<16x256xf32>, vector<4x256xf32> -> vector<4x256xf32>
    %174 = arith.addf %165, %173 : vector<4x256xf32>
    %cst_113 = arith.constant 0.000000e+00 : f32
    %175 = vector.broadcast %cst_113 : f32 to vector<4x256xf32>
    %176 = arith.maximumf %174, %175 : vector<4x256xf32>
    %c8_114 = arith.constant 8 : index
    %c128_115 = arith.constant 128 : index
    %177 = vector.load %arg5[%c8_114, %c128_115] : memref<16x512xf32, #tpu.memory_space<vmem>>, vector<4x256xf32>
    tpu.vector_store %arg5[%c8_114, %c128_115], %176 {strides = array<i32>} : memref<16x512xf32, #tpu.memory_space<vmem>>, vector<4x256xf32>,
    %c2_116 = arith.constant 2 : index
    %c0_117 = arith.constant 0 : index
    %c0_118 = arith.constant 0 : index
    %178 = vector.load %arg3[%c2_116, %c0_117, %c0_118] : memref<3x4x1xf32, #tpu.memory_space<vmem>>, vector<1x4x1xf32>
    %179 = vector.shape_cast %178 : vector<1x4x1xf32> to vector<4x1xf32>
    %180 = vector.shape_cast %179 : vector<4x1xf32> to vector<4x1xf32>
    %181 = vector.broadcast %180 : vector<4x1xf32> to vector<4x256xf32>
    %c0_119 = arith.constant 0 : index
    %c111_120 = arith.constant 111 : index
    %182 = vector.load %arg5[%c0_119, %c111_120] : memref<16x512xf32, #tpu.memory_space<vmem>>, vector<16x256xf32>
    %cst_121 = arith.constant 0.000000e+00 : f32
    %183 = vector.shape_cast %23 : vector<1x256xi1> to vector<1x256xi1>
    %184 = vector.broadcast %183 : vector<1x256xi1> to vector<16x256xi1>
    %185 = vector.broadcast %cst_121 : f32 to vector<16x256xf32>
    %186 = arith.select %184, %182, %185 : vector<16x256xi1>, vector<16x256xf32>
    %c18 = arith.constant 18 : index
    %c0_122 = arith.constant 0 : index
    %c0_123 = arith.constant 0 : index
    %187 = vector.load %arg2[%c18, %c0_122, %c0_123] : memref<27x4x16xf32, #tpu.memory_space<vmem>>, vector<1x4x16xf32>
    %188 = vector.shape_cast %187 : vector<1x4x16xf32> to vector<4x16xf32>
    %cst_124 = arith.constant dense<0.000000e+00> : vector<4x256xf32>
    %189 = tpu.matmul %188, %186, %cst_124 {dimension_numbers = #tpu.dot_dimension_numbers<[1], [0], [0], [1], [0, 0, 1, 1], [], []>} : vector<4x16xf32>, vector<16x256xf32>, vector<4x256xf32> -> vector<4x256xf32>
    %190 = arith.addf %181, %189 : vector<4x256xf32>
    %c0_125 = arith.constant 0 : index
    %c112_126 = arith.constant 112 : index
    %191 = vector.load %arg5[%c0_125, %c112_126] : memref<16x512xf32, #tpu.memory_space<vmem>>, vector<16x256xf32>
    %c19 = arith.constant 19 : index
    %c0_127 = arith.constant 0 : index
    %c0_128 = arith.constant 0 : index
    %192 = vector.load %arg2[%c19, %c0_127, %c0_128] : memref<27x4x16xf32, #tpu.memory_space<vmem>>, vector<1x4x16xf32>
    %193 = vector.shape_cast %192 : vector<1x4x16xf32> to vector<4x16xf32>
    %cst_129 = arith.constant dense<0.000000e+00> : vector<4x256xf32>
    %194 = tpu.matmul %193, %191, %cst_129 {dimension_numbers = #tpu.dot_dimension_numbers<[1], [0], [0], [1], [0, 0, 1, 1], [], []>} : vector<4x16xf32>, vector<16x256xf32>, vector<4x256xf32> -> vector<4x256xf32>
    %195 = arith.addf %190, %194 : vector<4x256xf32>
    %c0_130 = arith.constant 0 : index
    %c113_131 = arith.constant 113 : index
    %196 = vector.load %arg5[%c0_130, %c113_131] : memref<16x512xf32, #tpu.memory_space<vmem>>, vector<16x256xf32>
    %cst_132 = arith.constant 0.000000e+00 : f32
    %197 = vector.shape_cast %25 : vector<1x256xi1> to vector<1x256xi1>
    %198 = vector.broadcast %197 : vector<1x256xi1> to vector<16x256xi1>
    %199 = vector.broadcast %cst_132 : f32 to vector<16x256xf32>
    %200 = arith.select %198, %196, %199 : vector<16x256xi1>, vector<16x256xf32>
    %c20 = arith.constant 20 : index
    %c0_133 = arith.constant 0 : index
    %c0_134 = arith.constant 0 : index
    %201 = vector.load %arg2[%c20, %c0_133, %c0_134] : memref<27x4x16xf32, #tpu.memory_space<vmem>>, vector<1x4x16xf32>
    %202 = vector.shape_cast %201 : vector<1x4x16xf32> to vector<4x16xf32>
    %cst_135 = arith.constant dense<0.000000e+00> : vector<4x256xf32>
    %203 = tpu.matmul %202, %200, %cst_135 {dimension_numbers = #tpu.dot_dimension_numbers<[1], [0], [0], [1], [0, 0, 1, 1], [], []>} : vector<4x16xf32>, vector<16x256xf32>, vector<4x256xf32> -> vector<4x256xf32>
    %204 = arith.addf %195, %203 : vector<4x256xf32>
    %c0_136 = arith.constant 0 : index
    %c127_137 = arith.constant 127 : index
    %205 = vector.load %arg5[%c0_136, %c127_137] : memref<16x512xf32, #tpu.memory_space<vmem>>, vector<16x256xf32>
    %cst_138 = arith.constant 0.000000e+00 : f32
    %206 = vector.shape_cast %23 : vector<1x256xi1> to vector<1x256xi1>
    %207 = vector.broadcast %206 : vector<1x256xi1> to vector<16x256xi1>
    %208 = vector.broadcast %cst_138 : f32 to vector<16x256xf32>
    %209 = arith.select %207, %205, %208 : vector<16x256xi1>, vector<16x256xf32>
    %c21 = arith.constant 21 : index
    %c0_139 = arith.constant 0 : index
    %c0_140 = arith.constant 0 : index
    %210 = vector.load %arg2[%c21, %c0_139, %c0_140] : memref<27x4x16xf32, #tpu.memory_space<vmem>>, vector<1x4x16xf32>
    %211 = vector.shape_cast %210 : vector<1x4x16xf32> to vector<4x16xf32>
    %cst_141 = arith.constant dense<0.000000e+00> : vector<4x256xf32>
    %212 = tpu.matmul %211, %209, %cst_141 {dimension_numbers = #tpu.dot_dimension_numbers<[1], [0], [0], [1], [0, 0, 1, 1], [], []>} : vector<4x16xf32>, vector<16x256xf32>, vector<4x256xf32> -> vector<4x256xf32>
    %213 = arith.addf %204, %212 : vector<4x256xf32>
    %c0_142 = arith.constant 0 : index
    %c128_143 = arith.constant 128 : index
    %214 = vector.load %arg5[%c0_142, %c128_143] : memref<16x512xf32, #tpu.memory_space<vmem>>, vector<16x256xf32>
    %c22 = arith.constant 22 : index
    %c0_144 = arith.constant 0 : index
    %c0_145 = arith.constant 0 : index
    %215 = vector.load %arg2[%c22, %c0_144, %c0_145] : memref<27x4x16xf32, #tpu.memory_space<vmem>>, vector<1x4x16xf32>
    %216 = vector.shape_cast %215 : vector<1x4x16xf32> to vector<4x16xf32>
    %cst_146 = arith.constant dense<0.000000e+00> : vector<4x256xf32>
    %217 = tpu.matmul %216, %214, %cst_146 {dimension_numbers = #tpu.dot_dimension_numbers<[1], [0], [0], [1], [0, 0, 1, 1], [], []>} : vector<4x16xf32>, vector<16x256xf32>, vector<4x256xf32> -> vector<4x256xf32>
    %218 = arith.addf %213, %217 : vector<4x256xf32>
    %c0_147 = arith.constant 0 : index
    %c129_148 = arith.constant 129 : index
    %219 = vector.load %arg5[%c0_147, %c129_148] : memref<16x512xf32, #tpu.memory_space<vmem>>, vector<16x256xf32>
    %cst_149 = arith.constant 0.000000e+00 : f32
    %220 = vector.shape_cast %25 : vector<1x256xi1> to vector<1x256xi1>
    %221 = vector.broadcast %220 : vector<1x256xi1> to vector<16x256xi1>
    %222 = vector.broadcast %cst_149 : f32 to vector<16x256xf32>
    %223 = arith.select %221, %219, %222 : vector<16x256xi1>, vector<16x256xf32>
    %c23 = arith.constant 23 : index
    %c0_150 = arith.constant 0 : index
    %c0_151 = arith.constant 0 : index
    %224 = vector.load %arg2[%c23, %c0_150, %c0_151] : memref<27x4x16xf32, #tpu.memory_space<vmem>>, vector<1x4x16xf32>
    %225 = vector.shape_cast %224 : vector<1x4x16xf32> to vector<4x16xf32>
    %cst_152 = arith.constant dense<0.000000e+00> : vector<4x256xf32>
    %226 = tpu.matmul %225, %223, %cst_152 {dimension_numbers = #tpu.dot_dimension_numbers<[1], [0], [0], [1], [0, 0, 1, 1], [], []>} : vector<4x16xf32>, vector<16x256xf32>, vector<4x256xf32> -> vector<4x256xf32>
    %227 = arith.addf %218, %226 : vector<4x256xf32>
    %c0_153 = arith.constant 0 : index
    %c143_154 = arith.constant 143 : index
    %228 = vector.load %arg5[%c0_153, %c143_154] : memref<16x512xf32, #tpu.memory_space<vmem>>, vector<16x256xf32>
    %cst_155 = arith.constant 0.000000e+00 : f32
    %229 = vector.shape_cast %23 : vector<1x256xi1> to vector<1x256xi1>
    %230 = vector.broadcast %229 : vector<1x256xi1> to vector<16x256xi1>
    %231 = vector.broadcast %cst_155 : f32 to vector<16x256xf32>
    %232 = arith.select %230, %228, %231 : vector<16x256xi1>, vector<16x256xf32>
    %c24 = arith.constant 24 : index
    %c0_156 = arith.constant 0 : index
    %c0_157 = arith.constant 0 : index
    %233 = vector.load %arg2[%c24, %c0_156, %c0_157] : memref<27x4x16xf32, #tpu.memory_space<vmem>>, vector<1x4x16xf32>
    %234 = vector.shape_cast %233 : vector<1x4x16xf32> to vector<4x16xf32>
    %cst_158 = arith.constant dense<0.000000e+00> : vector<4x256xf32>
    %235 = tpu.matmul %234, %232, %cst_158 {dimension_numbers = #tpu.dot_dimension_numbers<[1], [0], [0], [1], [0, 0, 1, 1], [], []>} : vector<4x16xf32>, vector<16x256xf32>, vector<4x256xf32> -> vector<4x256xf32>
    %236 = arith.addf %227, %235 : vector<4x256xf32>
    %c0_159 = arith.constant 0 : index
    %c144_160 = arith.constant 144 : index
    %237 = vector.load %arg5[%c0_159, %c144_160] : memref<16x512xf32, #tpu.memory_space<vmem>>, vector<16x256xf32>
    %c25 = arith.constant 25 : index
    %c0_161 = arith.constant 0 : index
    %c0_162 = arith.constant 0 : index
    %238 = vector.load %arg2[%c25, %c0_161, %c0_162] : memref<27x4x16xf32, #tpu.memory_space<vmem>>, vector<1x4x16xf32>
    %239 = vector.shape_cast %238 : vector<1x4x16xf32> to vector<4x16xf32>
    %cst_163 = arith.constant dense<0.000000e+00> : vector<4x256xf32>
    %240 = tpu.matmul %239, %237, %cst_163 {dimension_numbers = #tpu.dot_dimension_numbers<[1], [0], [0], [1], [0, 0, 1, 1], [], []>} : vector<4x16xf32>, vector<16x256xf32>, vector<4x256xf32> -> vector<4x256xf32>
    %241 = arith.addf %236, %240 : vector<4x256xf32>
    %c0_164 = arith.constant 0 : index
    %c145_165 = arith.constant 145 : index
    %242 = vector.load %arg5[%c0_164, %c145_165] : memref<16x512xf32, #tpu.memory_space<vmem>>, vector<16x256xf32>
    %cst_166 = arith.constant 0.000000e+00 : f32
    %243 = vector.shape_cast %25 : vector<1x256xi1> to vector<1x256xi1>
    %244 = vector.broadcast %243 : vector<1x256xi1> to vector<16x256xi1>
    %245 = vector.broadcast %cst_166 : f32 to vector<16x256xf32>
    %246 = arith.select %244, %242, %245 : vector<16x256xi1>, vector<16x256xf32>
    %c26 = arith.constant 26 : index
    %c0_167 = arith.constant 0 : index
    %c0_168 = arith.constant 0 : index
    %247 = vector.load %arg2[%c26, %c0_167, %c0_168] : memref<27x4x16xf32, #tpu.memory_space<vmem>>, vector<1x4x16xf32>
    %248 = vector.shape_cast %247 : vector<1x4x16xf32> to vector<4x16xf32>
    %cst_169 = arith.constant dense<0.000000e+00> : vector<4x256xf32>
    %249 = tpu.matmul %248, %246, %cst_169 {dimension_numbers = #tpu.dot_dimension_numbers<[1], [0], [0], [1], [0, 0, 1, 1], [], []>} : vector<4x16xf32>, vector<16x256xf32>, vector<4x256xf32> -> vector<4x256xf32>
    %250 = arith.addf %241, %249 : vector<4x256xf32>
    %cst_170 = arith.constant 0.000000e+00 : f32
    %251 = vector.broadcast %cst_170 : f32 to vector<4x256xf32>
    %252 = arith.maximumf %250, %251 : vector<4x256xf32>
    %c12_171 = arith.constant 12 : index
    %c128_172 = arith.constant 128 : index
    %253 = vector.load %arg5[%c12_171, %c128_172] : memref<16x512xf32, #tpu.memory_space<vmem>>, vector<4x256xf32>
    tpu.vector_store %arg5[%c12_171, %c128_172], %252 {strides = array<i32>} : memref<16x512xf32, #tpu.memory_space<vmem>>, vector<4x256xf32>,
    %c0_173 = arith.constant 0 : index
    %c128_174 = arith.constant 128 : index
    %254 = vector.load %arg5[%c0_173, %c128_174] : memref<16x512xf32, #tpu.memory_space<vmem>>, vector<16x256xf32>
    %c0_175 = arith.constant 0 : index
    %c0_176 = arith.constant 0 : index
    %c0_177 = arith.constant 0 : index
    %255 = vector.load %arg4[%c0_175, %c0_176, %c0_177] : memref<1x16x256xf32, #tpu.memory_space<vmem>>, vector<1x16x256xf32>
    %256 = vector.shape_cast %255 : vector<1x16x256xf32> to vector<16x256xf32>
    %257 = vector.shape_cast %254 : vector<16x256xf32> to vector<1x16x256xf32>
    tpu.vector_store %arg4[%c0_175, %c0_176, %c0_177], %257 {strides = array<i32>} : memref<1x16x256xf32, #tpu.memory_space<vmem>>, vector<1x16x256xf32>,
    return
  }
  func.func @transform_0(%arg0: i32) -> (i32, i32, i32) {
    %c0_i32 = arith.constant 0 : i32
    %c0_i32_0 = arith.constant 0 : i32
    %c0_i32_1 = arith.constant 0 : i32
    return %arg0, %c0_i32, %c0_i32_0 : i32, i32, i32
  }
  func.func @transform_1(%arg0: i32) -> (i32, i32, i32) {
    %c0_i32 = arith.constant 0 : i32
    %c0_i32_0 = arith.constant 0 : i32
    %c0_i32_1 = arith.constant 0 : i32
    %c0_i32_2 = arith.constant 0 : i32
    return %c0_i32, %c0_i32_0, %c0_i32_1 : i32, i32, i32
  }
  func.func @transform_2(%arg0: i32) -> (i32, i32, i32) {
    %c0_i32 = arith.constant 0 : i32
    %c0_i32_0 = arith.constant 0 : i32
    %c0_i32_1 = arith.constant 0 : i32
    %c0_i32_2 = arith.constant 0 : i32
    return %c0_i32, %c0_i32_0, %c0_i32_1 : i32, i32, i32
  }
  func.func @transform_3(%arg0: i32) -> (i32, i32, i32) {
    %c0_i32 = arith.constant 0 : i32
    %c0_i32_0 = arith.constant 0 : i32
    %c0_i32_1 = arith.constant 0 : i32
    return %arg0, %c0_i32, %c0_i32_0 : i32, i32, i32
  }
}

</mosaic_0001>

<llo_original>
// kernel: tpu_custom_call.1
$region0: #{tpu_custom_call.1}
  #allocation0 [shape = 'u32[]', space=smem, size = 0x4, offset = 0x4, fixed_abs, tag = 'smem constant byte address 0x4 - core index']
  #allocation1 [shape = 'u32[72,128]{1,0:T(1,128)}', space=vmem, size = 0x9000, scoped, tag = 'internal scratch']
  #allocation2 [shape = 'f32[16,512]{1,0:T(8,128)}', space=vmem, size = 0x8000, scoped, tag = 'scratch operand']
  %s0 = inlined_call_operand.vmem [shape: f32[2,4,256], index: 0, kind: input, shape index: {}]
  %s1 = inlined_call_operand.vmem [shape: f32[27,4,16], index: 1, kind: input, shape index: {}]
  %s2 = inlined_call_operand.vmem [shape: f32[3,4,1], index: 2, kind: input, shape index: {}]
  %s3 = inlined_call_operand.hbm [shape: f32[2,16,256], index: 3, kind: output, shape index: {}]
  %s4 = sld [smem:[#allocation0]]
  $region45: #{tpu_custom_call.1} parent=0
    _
  %s6 = ssub.s32 1, %s4
  %s7 = scalar_select 0, %s6, %s4
  $region1: #{tpu_custom_call.1} parent=0
    #allocation3 [shape = 'u8[32768]{0}', space=vmem, size = 0x8000, scoped, tag = 'output window, operand 0']
    #allocation4 [shape = 's32[2]{0}', space=sflag, size = 0x8, scoped, tag = 'scoped memory for tpu_custom_call.1']
    %8 = vsyncpa [#allocation4], 0
    %s9 = scalar_lea.sflag [#allocation4], 1
    %10 = vsyncpa %s9, 0
    loop: start=0, step=1, limit=4
    $region2: #{tpu_custom_call.1} parent=1 // loop_pre_header
      _
    $region3: #{tpu_custom_call.1} parent=1 // loop_header
      %s12 = sphi 0, %s16
      %p13 = scmp.ge.s32.totalorder %s12, 4
      %s22 = sphi 0, %s24
      %s25 = sphi 0, %s22
      %s26 = sphi 0, %s25
      %s42 = sphi 0, %s26
      %s46 = sphi 0, %s46
      %s48 = sphi 0, %s46
      %s49 = sphi 0, %s48
      %s63 = sphi 0, %s49
      %s67 = sphi 0, %s67
      %s69 = sphi 0, %s67
      %s70 = sphi 0, %s69
      %s84 = sphi 0, %s70
      %s90 = sphi 0, %s92
      %s93 = sphi 0, %s90
      %s94 = sphi 0, %s93
      %s110 = sphi 0, %s94
    $region4: #{tpu_custom_call.1} parent=1 // loop_header_branch
      %15 = sbr.rel (%p13) target = $region8
    $region5: #{tpu_custom_call.1} parent=1 // loop_body
      %s17 = ssub.s32 %s12, 1
      %s18 = ssub.s32 %s12, 2
      %s19 = sadd.s32 %s12, 1
      %s20 = ssub.s32 %s12, %s19
      %p21 = scmp.eq.s32.totalorder %s20, 0
      %s23 = sadd.s32 %s22, 1
      %s24 = scalar_select %p21, %s22, %s23
      %p27 = pneg %p21
      %p28 = scmp.eq.s32.totalorder %s12, 1
      %p29 = por %p27, %p28
      %p30 = scmp.ne.s32.totalorder %s22, %s25
      %p31 = scmp.eq.s32.totalorder %s12, 0
      %p32 = por %p30, %p31
      %p33 = scmp.ne.s32.totalorder %s22, %s25
      %p34 = scmp.eq.s32.totalorder %s17, 1
      %p35 = por %p33, %p34
      %p36 = scmp.ne.s32.totalorder %s25, %s26
      %p37 = scmp.eq.s32.totalorder %s17, 0
      %p38 = por %p36, %p37
      %p39 = scmp.ne.s32.totalorder %s25, %s26
      %p40 = scmp.eq.s32.totalorder %s18, 1
      %p41 = por %p39, %p40
      %p43 = scmp.ne.s32.totalorder %s26, %s42
      %p44 = scmp.eq.s32.totalorder %s18, 0
      %p45 = por %p43, %p44
      %s47 = sadd.s32 %s46, 1
      %p50 = scmp.eq.s32.totalorder %s12, 1
      %p51 = scmp.ne.s32.totalorder %s46, %s48
      %p52 = scmp.eq.s32.totalorder %s12, 0
      %p53 = por %p51, %p52
      %p54 = scmp.ne.s32.totalorder %s46, %s48
      %p55 = scmp.eq.s32.totalorder %s17, 1
      %p56 = por %p54, %p55
      %p57 = scmp.ne.s32.totalorder %s48, %s49
      %p58 = scmp.eq.s32.totalorder %s17, 0
      %p59 = por %p57, %p58
      %p60 = scmp.ne.s32.totalorder %s48, %s49
      %p61 = scmp.eq.s32.totalorder %s18, 1
      %p62 = por %p60, %p61
      %p64 = scmp.ne.s32.totalorder %s49, %s63
      %p65 = scmp.eq.s32.totalorder %s18, 0
      %p66 = por %p64, %p65
      %s68 = sadd.s32 %s67, 1
      %p71 = scmp.eq.s32.totalorder %s12, 1
      %p72 = scmp.ne.s32.totalorder %s67, %s69
      %p73 = scmp.eq.s32.totalorder %s12, 0
      %p74 = por %p72, %p73
      %p75 = scmp.ne.s32.totalorder %s67, %s69
      %p76 = scmp.eq.s32.totalorder %s17, 1
      %p77 = por %p75, %p76
      %p78 = scmp.ne.s32.totalorder %s69, %s70
      %p79 = scmp.eq.s32.totalorder %s17, 0
      %p80 = por %p78, %p79
      %p81 = scmp.ne.s32.totalorder %s69, %s70
      %p82 = scmp.eq.s32.totalorder %s18, 1
      %p83 = por %p81, %p82
      %p85 = scmp.ne.s32.totalorder %s70, %s84
      %p86 = scmp.eq.s32.totalorder %s18, 0
      %p87 = por %p85, %p86
      %s88 = ssub.s32 %s12, %s19
      %p89 = scmp.eq.s32.totalorder %s88, 0
      %s91 = sadd.s32 %s90, 1
      %s92 = scalar_select %p89, %s90, %s91
      %p95 = pneg %p89
      %p96 = scmp.eq.s32.totalorder %s12, 1
      %p97 = por %p95, %p96
      %p98 = scmp.ne.s32.totalorder %s90, %s93
      %p99 = scmp.eq.s32.totalorder %s12, 0
      %p100 = por %p98, %p99
      %p101 = scmp.ne.s32.totalorder %s90, %s93
      %p102 = scmp.eq.s32.totalorder %s17, 1
      %p103 = por %p101, %p102
      %p104 = scmp.ne.s32.totalorder %s93, %s94
      %p105 = scmp.eq.s32.totalorder %s17, 0
      %p106 = por %p104, %p105
      %p107 = scmp.ne.s32.totalorder %s93, %s94
      %p108 = scmp.eq.s32.totalorder %s18, 1
      %p109 = por %p107, %p108
      %p111 = scmp.ne.s32.totalorder %s94, %s110
      %p112 = scmp.eq.s32.totalorder %s18, 0
      %p113 = por %p111, %p112
      %p114 = scmp.le.s32.totalorder 1, %s12
      %p115 = scmp.lt.s32.totalorder %s12, 3
      %p116 = pnand %p114, %p115
      %p117 = pneg %p116
      // Predicated region
      $region9: #{tpu_custom_call.1} parent=5 // pred_check
        _
      $region10: #{tpu_custom_call.1} parent=5 // pred_check_branch
        %119 = sbr.rel (%p116) target = $region12
      $region11: #{tpu_custom_call.1} parent=5 // pred_region
        %s120 = ssub.s32 %s12, 1
        // Predicated region
        $region13: #{tpu_custom_call.1} parent=11 // pred_check
          %p121 = pneg %p59
        $region14: #{tpu_custom_call.1} parent=11 // pred_check_branch
          %123 = sbr.rel (%p121) target = $region16
        $region15: #{tpu_custom_call.1} parent=11 // pred_region
          _
        $region16: #{tpu_custom_call.1} parent=11 // pred_fallthru
          _
        // Predicated region
        $region17: #{tpu_custom_call.1} parent=11 // pred_check
          %p124 = pneg %p80
        $region18: #{tpu_custom_call.1} parent=11 // pred_check_branch
          %126 = sbr.rel (%p124) target = $region20
        $region19: #{tpu_custom_call.1} parent=11 // pred_region
          _
        $region20: #{tpu_custom_call.1} parent=11 // pred_fallthru
          _
      $region12: #{tpu_custom_call.1} parent=5 // pred_fallthru
        _
      %p127 = scmp.lt.s32.totalorder %s12, 2
      // Predicated region
      $region21: #{tpu_custom_call.1} parent=5 // pred_check
        %p128 = pneg %p127
      $region22: #{tpu_custom_call.1} parent=5 // pred_check_branch
        %130 = sbr.rel (%p128) target = $region24
      $region23: #{tpu_custom_call.1} parent=5 // pred_region
        // Predicated region
        $region25: #{tpu_custom_call.1} parent=23 // pred_check
          %p131 = pneg %p32
        $region26: #{tpu_custom_call.1} parent=23 // pred_check_branch
          %133 = sbr.rel (%p131) target = $region28
        $region27: #{tpu_custom_call.1} parent=23 // pred_region
          %p134 = scmp.lt.s32.totalorder %s12, 1
          %s135 = scalar_select %p134, %s12, 1
          %s136 = smul.addr %s135, 2
          %s137 = smul.addr %s136, 4
          %s138 = scalar_lea.vmem %s0, %s137
        $region28: #{tpu_custom_call.1} parent=23 // pred_fallthru
          _
      $region24: #{tpu_custom_call.1} parent=5 // pred_fallthru
        _
      %p139 = scmp.le.s32.totalorder 1, %s12
      %p140 = scmp.lt.s32.totalorder %s12, 3
      %p141 = pnand %p139, %p140
      %p142 = pneg %p141
      // Predicated region
      $region29: #{tpu_custom_call.1} parent=5 // pred_check
        _
      $region30: #{tpu_custom_call.1} parent=5 // pred_check_branch
        %144 = sbr.rel (%p141) target = $region32
      $region31: #{tpu_custom_call.1} parent=5 // pred_region
        %s145 = ssub.s32 %s12, 1
        %p146 = scmp.lt.s32.totalorder %s17, 1
        %s147 = scalar_select %p146, %s17, 1
        %s148 = smul.addr %s147, 2
        %s149 = smul.addr %s148, 4
        %s150 = scalar_lea.vmem %s0, %s149
        %p151 = pneg %p38
        %p152 = pneg %p35
        %p153 = pneg %p59
        %p154 = pneg %p56
        %p155 = pneg %p80
        %p156 = pneg %p77
        %p157 = pneg %p106
        %p158 = pneg %p103
        %s159 = sand.u32 %s93, 1
        %s160 = scalar_lea.sflag [#allocation4], %s159
        %s161 = sand.u32 %s93, 1
        %s162 = smul.addr %s161, 32
        %s163 = scalar_lea.vmem [#allocation3], %s162
        %p164 = scmp.lt.s32.totalorder %s17, 1
        %s165 = scalar_select %p164, %s17, 1
        %s166 = smul.addr %s165, 2
        %s167 = smul.addr %s166, 4
        %s168 = scalar_lea.vmem %s0, %s167
        %169 = vst [vmem:[#allocation2] sm:$0xff] 0.0
        %170 = vst [vmem:[#allocation2 + $0x8] sm:$0xff] 0.0
        %171 = vst [vmem:[#allocation2 + $0x10] sm:$0xff] 0.0
        %172 = vst [vmem:[#allocation2 + $0x18] sm:$0xff] 0.0
        %173 = vst [vmem:[#allocation2 + $0x20] sm:$0xff] 0.0
        %174 = vst [vmem:[#allocation2 + $0x28] sm:$0xff] 0.0
        %175 = vst [vmem:[#allocation2 + $0x30] sm:$0xff] 0.0
        %176 = vst [vmem:[#allocation2 + $0x38] sm:$0xff] 0.0
        %v177 = vld [vmem:[%s168] sm:$0xff]
        %179 = vst [vmem:[#allocation1] ss:$2 sm:$0xff] %v177
        %v180 = vld.sshfl [vmem:[#allocation1] sm:$0xff pattern:$0x75316420]
        %v181 = vld.sshfl [vmem:[#allocation1 + $0x8] sm:$0xff pattern:$0x75316420]
        %184 = vst [vmem:[#allocation2 + $0x8] sm:$0xf] %v180
        %185 = vst [vmem:[#allocation2 + $0x10] sm:$0xf] %v181
        %v186 = vlaneseq
        %v187 = vand.u32 %v186, 127
        %v188 = vadd.s32 %v187, 128
        %vm189 = vcmp.lt.s32.totalorder %v187, 0
        %v190 = vsub.s32 0, %v187
        %v191 = vsel %vm189, %v190, %v187
        %v192 = vshrl.u32 %v191, 4
        %v193 = vand.u32 %v191, 15
        %v194 = vsub.s32 0, %v193
        %v195 = vsel %vm189, %v194, %v193
        %vm196 = vcmp.lt.s32.totalorder %v188, 0
        %v197 = vsub.s32 0, %v188
        %v198 = vsel %vm196, %v197, %v188
        %v199 = vshrl.u32 %v198, 4
        %v200 = vand.u32 %v198, 15
        %v201 = vsub.s32 0, %v200
        %v202 = vsel %vm196, %v201, %v200
        %vm203 = vcmp.ne.s32.totalorder %v195, 0
        %vm204 = vcmp.ne.s32.totalorder %v202, 0
        %vm205 = vcmp.lt.s32.totalorder %v195, 0
        %vm206 = vcmp.lt.s32.totalorder %v202, 0
        %vm207 = vmand %vm205, %vm203
        %vm208 = vmand %vm206, %vm204
        %v209 = vadd.s32 %v195, 16
        %v210 = vadd.s32 %v202, 16
        %v211 = vsel %vm207, %v209, %v195
        %v212 = vsel %vm208, %v210, %v202
        %vm213 = vcmp.ge.s32.totalorder %v211, 1
        %vm214 = vcmp.ge.s32.totalorder %v212, 1
        %vm215 = vcmp.le.s32.totalorder %v211, 14
        %vm216 = vcmp.le.s32.totalorder %v212, 14
        %v217 = vld [vmem:[%s2] sm:$0xf]
        %219 = vset.pattern.permute.xlu0 0
        %220 = vperm.xlu0 %219, %v217
        %v221 = vpop.permute.xlu0 %220
        %v223 = vld [vmem:[#allocation2] sm:$0xff]
        %v224 = vld [vmem:[#allocation2 + $0x8] sm:$0xff]
        %v225 = vld [vmem:[#allocation2 + $0x10] sm:$0xff]
        %v226 = vld [vmem:[#allocation2 + $0x20] sm:$0xff]
        %v227 = vld [vmem:[#allocation2 + $0x28] sm:$0xff]
        %v228 = vld [vmem:[#allocation2 + $0x30] sm:$0xff]
        %v229 = vsel %vm213, 1, 0
        %v230 = vsel %vm214, 1, 0
        %vm231 = vcmp.eq.s32.totalorder %v229, 1
        %vm232 = vcmp.eq.s32.totalorder %v230, 1
        %239 = vrot.lane.b32.xlu0 %v223, 17
        %v240 = vpop.permute.xlu0 %239
        %241 = vrot.lane.b32.xlu0 %v224, 17
        %v242 = vpop.permute.xlu0 %241
        %243 = vrot.lane.b32.xlu0 %v225, 17
        %v244 = vpop.permute.xlu0 %243
        %245 = vrot.lane.b32.xlu0 %v226, 17
        %v246 = vpop.permute.xlu0 %245
        %247 = vrot.lane.b32.xlu0 %v227, 17
        %v248 = vpop.permute.xlu0 %247
        %249 = vrot.lane.b32.xlu0 %v228, 17
        %v250 = vpop.permute.xlu0 %249
        %vm251 = vcmask 138240
        %v252 = vsel %vm251, %v240, %v242
        %v253 = vsel %vm251, %v242, %v244
        %v254 = vsel %vm251, %v246, %v248
        %v255 = vsel %vm251, %v248, %v250
        %v260 = vsel %vm231, %v252, 0.0
        %v261 = vsel %vm232, %v253, 0.0
        %v262 = vsel %vm231, %v254, 0.0
        %v263 = vsel %vm232, %v255, 0.0
        %v264 = vld [vmem:[%s1] sm:$0xf]
        %vm265 = vcmask 130048
        %v267 = vsel %vm265, %v264, 0
        %269 = vmatpush.msra.mxu0 0.0
        %270 = vmatpush.msra.mxu0 0.0
        %271 = vmatpush.msra.mxu0 0.0
        %272 = vmatpush.msra.mxu0 0.0
        %273 = vmatpush.msra.mxu0 0.0
        %274 = vmatpush.msra.mxu0 0.0
        %275 = vmatpush.msra.mxu0 0.0
        %276 = vmatpush.msra.mxu0 0.0
        %277 = vmatpush.msra.mxu0 0.0
        %278 = vmatpush.msra.mxu0 0.0
        %279 = vmatpush.msra.mxu0 0.0
        %280 = vmatpush.msra.mxu0 0.0
        %281 = vmatpush.msra.mxu0 0.0
        %282 = vmatpush.msra.mxu0 0.0
        %283 = vmatpush.msra.mxu0 %v262
        %284 = vmatpush.msra.mxu0 %v260
        %285 = vmatmul.f32.gmra.mxu0 %v267
        %v286 = vpop.f32.mrf.mxu0
        %v287 = vadd.f32 0.0, %v286
        %288 = vdwg.mxu0
        %289 = vmatpush.msra.mxu0 0.0
        %290 = vmatpush.msra.mxu0 0.0
        %291 = vmatpush.msra.mxu0 0.0
        %292 = vmatpush.msra.mxu0 0.0
        %293 = vmatpush.msra.mxu0 0.0
        %294 = vmatpush.msra.mxu0 0.0
        %295 = vmatpush.msra.mxu0 0.0
        %296 = vmatpush.msra.mxu0 0.0
        %297 = vmatpush.msra.mxu0 0.0
        %298 = vmatpush.msra.mxu0 0.0
        %299 = vmatpush.msra.mxu0 0.0
        %300 = vmatpush.msra.mxu0 0.0
        %301 = vmatpush.msra.mxu0 0.0
        %302 = vmatpush.msra.mxu0 0.0
        %303 = vmatpush.msra.mxu0 %v263
        %304 = vmatpush.msra.mxu0 %v261
        %305 = vmatmul.f32.gmra.mxu0 %v267
        %v306 = vpop.f32.mrf.mxu0
        %v307 = vadd.f32 0.0, %v306
        %308 = vdwg.mxu0
        %v309 = vadd.f32 %v221, %v287
        %v310 = vadd.f32 %v221, %v307
        %s311 = scalar_lea.vmem %s1, 4
        %v312 = vld [vmem:[%s311] sm:$0xf]
        %313 = vrot.lane.b32.xlu0 %v223, 16
        %v314 = vpop.permute.xlu0 %313
        %315 = vrot.lane.b32.xlu0 %v224, 16
        %v316 = vpop.permute.xlu0 %315
        %317 = vrot.lane.b32.xlu0 %v225, 16
        %v318 = vpop.permute.xlu0 %317
        %319 = vrot.lane.b32.xlu0 %v226, 16
        %v320 = vpop.permute.xlu0 %319
        %321 = vrot.lane.b32.xlu0 %v227, 16
        %v322 = vpop.permute.xlu0 %321
        %323 = vrot.lane.b32.xlu0 %v228, 16
        %v324 = vpop.permute.xlu0 %323
        %v325 = vsel %vm265, %v314, %v316
        %v326 = vsel %vm265, %v316, %v318
        %v327 = vsel %vm265, %v320, %v322
        %v328 = vsel %vm265, %v322, %v324
        %v334 = vsel %vm265, %v312, 0
        %336 = vmatpush.msra.mxu0 0.0
        %337 = vmatpush.msra.mxu0 0.0
        %338 = vmatpush.msra.mxu0 0.0
        %339 = vmatpush.msra.mxu0 0.0
        %340 = vmatpush.msra.mxu0 0.0
        %341 = vmatpush.msra.mxu0 0.0
        %342 = vmatpush.msra.mxu0 0.0
        %343 = vmatpush.msra.mxu0 0.0
        %344 = vmatpush.msra.mxu0 0.0
        %345 = vmatpush.msra.mxu0 0.0
        %346 = vmatpush.msra.mxu0 0.0
        %347 = vmatpush.msra.mxu0 0.0
        %348 = vmatpush.msra.mxu0 0.0
        %349 = vmatpush.msra.mxu0 0.0
        %350 = vmatpush.msra.mxu0 %v327
        %351 = vmatpush.msra.mxu0 %v325
        %352 = vmatmul.f32.gmra.mxu0 %v334
        %v353 = vpop.f32.mrf.mxu0
        %v354 = vadd.f32 0.0, %v353
        %355 = vdwg.mxu0
        %356 = vmatpush.msra.mxu0 0.0
        %357 = vmatpush.msra.mxu0 0.0
        %358 = vmatpush.msra.mxu0 0.0
        %359 = vmatpush.msra.mxu0 0.0
        %360 = vmatpush.msra.mxu0 0.0
        %361 = vmatpush.msra.mxu0 0.0
        %362 = vmatpush.msra.mxu0 0.0
        %363 = vmatpush.msra.mxu0 0.0
        %364 = vmatpush.msra.mxu0 0.0
        %365 = vmatpush.msra.mxu0 0.0
        %366 = vmatpush.msra.mxu0 0.0
        %367 = vmatpush.msra.mxu0 0.0
        %368 = vmatpush.msra.mxu0 0.0
        %369 = vmatpush.msra.mxu0 0.0
        %370 = vmatpush.msra.mxu0 %v328
        %371 = vmatpush.msra.mxu0 %v326
        %372 = vmatmul.f32.gmra.mxu0 %v334
        %v373 = vpop.f32.mrf.mxu0
        %v374 = vadd.f32 0.0, %v373
        %375 = vdwg.mxu0
        %v376 = vadd.f32 %v309, %v354
        %v377 = vadd.f32 %v310, %v374
        %v378 = vsel %vm215, 1, 0
        %v379 = vsel %vm216, 1, 0
        %vm380 = vcmp.eq.s32.totalorder %v378, 1
        %vm381 = vcmp.eq.s32.totalorder %v379, 1
        %382 = vrot.lane.b32.xlu0 %v223, 15
        %v383 = vpop.permute.xlu0 %382
        %384 = vrot.lane.b32.xlu0 %v224, 15
        %v385 = vpop.permute.xlu0 %384
        %386 = vrot.lane.b32.xlu0 %v225, 15
        %v387 = vpop.permute.xlu0 %386
        %388 = vrot.lane.b32.xlu0 %v226, 15
        %v389 = vpop.permute.xlu0 %388
        %390 = vrot.lane.b32.xlu0 %v227, 15
        %v391 = vpop.permute.xlu0 %390
        %392 = vrot.lane.b32.xlu0 %v228, 15
        %v393 = vpop.permute.xlu0 %392
        %vm394 = vcmask 121856
        %v395 = vsel %vm394, %v383, %v385
        %v396 = vsel %vm394, %v385, %v387
        %v397 = vsel %vm394, %v389, %v391
        %v398 = vsel %vm394, %v391, %v393
        %v403 = vsel %vm380, %v395, 0.0
        %v404 = vsel %vm381, %v396, 0.0
        %v405 = vsel %vm380, %v397, 0.0
        %v406 = vsel %vm381, %v398, 0.0
        %s407 = scalar_lea.vmem %s1, 8
        %v408 = vld [vmem:[%s407] sm:$0xf]
        %v410 = vsel %vm265, %v408, 0
        %412 = vmatpush.msra.mxu0 0.0
        %413 = vmatpush.msra.mxu0 0.0
        %414 = vmatpush.msra.mxu0 0.0
        %415 = vmatpush.msra.mxu0 0.0
        %416 = vmatpush.msra.mxu0 0.0
        %417 = vmatpush.msra.mxu0 0.0
        %418 = vmatpush.msra.mxu0 0.0
        %419 = vmatpush.msra.mxu0 0.0
        %420 = vmatpush.msra.mxu0 0.0
        %421 = vmatpush.msra.mxu0 0.0
        %422 = vmatpush.msra.mxu0 0.0
        %423 = vmatpush.msra.mxu0 0.0
        %424 = vmatpush.msra.mxu0 0.0
        %425 = vmatpush.msra.mxu0 0.0
        %426 = vmatpush.msra.mxu0 %v405
        %427 = vmatpush.msra.mxu0 %v403
        %428 = vmatmul.f32.gmra.mxu0 %v410
        %v429 = vpop.f32.mrf.mxu0
        %v430 = vadd.f32 0.0, %v429
        %431 = vdwg.mxu0
        %432 = vmatpush.msra.mxu0 0.0
        %433 = vmatpush.msra.mxu0 0.0
        %434 = vmatpush.msra.mxu0 0.0
        %435 = vmatpush.msra.mxu0 0.0
        %436 = vmatpush.msra.mxu0 0.0
        %437 = vmatpush.msra.mxu0 0.0
        %438 = vmatpush.msra.mxu0 0.0
        %439 = vmatpush.msra.mxu0 0.0
        %440 = vmatpush.msra.mxu0 0.0
        %441 = vmatpush.msra.mxu0 0.0
        %442 = vmatpush.msra.mxu0 0.0
        %443 = vmatpush.msra.mxu0 0.0
        %444 = vmatpush.msra.mxu0 0.0
        %445 = vmatpush.msra.mxu0 0.0
        %446 = vmatpush.msra.mxu0 %v406
        %447 = vmatpush.msra.mxu0 %v404
        %448 = vmatmul.f32.gmra.mxu0 %v410
        %v449 = vpop.f32.mrf.mxu0
        %v450 = vadd.f32 0.0, %v449
        %451 = vdwg.mxu0
        %v452 = vadd.f32 %v376, %v430
        %v453 = vadd.f32 %v377, %v450
        %454 = vrot.lane.b32.xlu0 %v223, 1
        %v455 = vpop.permute.xlu0 %454
        %456 = vrot.lane.b32.xlu0 %v224, 1
        %v457 = vpop.permute.xlu0 %456
        %458 = vrot.lane.b32.xlu0 %v225, 1
        %v459 = vpop.permute.xlu0 %458
        %460 = vrot.lane.b32.xlu0 %v226, 1
        %v461 = vpop.permute.xlu0 %460
        %462 = vrot.lane.b32.xlu0 %v227, 1
        %v463 = vpop.permute.xlu0 %462
        %464 = vrot.lane.b32.xlu0 %v228, 1
        %v465 = vpop.permute.xlu0 %464
        %vm466 = vcmask 7168
        %v467 = vsel %vm466, %v455, %v457
        %v468 = vsel %vm466, %v457, %v459
        %v469 = vsel %vm466, %v461, %v463
        %v470 = vsel %vm466, %v463, %v465
        %v475 = vsel %vm231, %v467, 0.0
        %v476 = vsel %vm232, %v468, 0.0
        %v477 = vsel %vm231, %v469, 0.0
        %v478 = vsel %vm232, %v470, 0.0
        %s479 = scalar_lea.vmem %s1, 12
        %v480 = vld [vmem:[%s479] sm:$0xf]
        %v482 = vsel %vm265, %v480, 0
        %484 = vmatpush.msra.mxu0 0.0
        %485 = vmatpush.msra.mxu0 0.0
        %486 = vmatpush.msra.mxu0 0.0
        %487 = vmatpush.msra.mxu0 0.0
        %488 = vmatpush.msra.mxu0 0.0
        %489 = vmatpush.msra.mxu0 0.0
        %490 = vmatpush.msra.mxu0 0.0
        %491 = vmatpush.msra.mxu0 0.0
        %492 = vmatpush.msra.mxu0 0.0
        %493 = vmatpush.msra.mxu0 0.0
        %494 = vmatpush.msra.mxu0 0.0
        %495 = vmatpush.msra.mxu0 0.0
        %496 = vmatpush.msra.mxu0 0.0
        %497 = vmatpush.msra.mxu0 0.0
        %498 = vmatpush.msra.mxu0 %v477
        %499 = vmatpush.msra.mxu0 %v475
        %500 = vmatmul.f32.gmra.mxu0 %v482
        %v501 = vpop.f32.mrf.mxu0
        %v502 = vadd.f32 0.0, %v501
        %503 = vdwg.mxu0
        %504 = vmatpush.msra.mxu0 0.0
        %505 = vmatpush.msra.mxu0 0.0
        %506 = vmatpush.msra.mxu0 0.0
        %507 = vmatpush.msra.mxu0 0.0
        %508 = vmatpush.msra.mxu0 0.0
        %509 = vmatpush.msra.mxu0 0.0
        %510 = vmatpush.msra.mxu0 0.0
        %511 = vmatpush.msra.mxu0 0.0
        %512 = vmatpush.msra.mxu0 0.0
        %513 = vmatpush.msra.mxu0 0.0
        %514 = vmatpush.msra.mxu0 0.0
        %515 = vmatpush.msra.mxu0 0.0
        %516 = vmatpush.msra.mxu0 0.0
        %517 = vmatpush.msra.mxu0 0.0
        %518 = vmatpush.msra.mxu0 %v478
        %519 = vmatpush.msra.mxu0 %v476
        %520 = vmatmul.f32.gmra.mxu0 %v482
        %v521 = vpop.f32.mrf.mxu0
        %v522 = vadd.f32 0.0, %v521
        %523 = vdwg.mxu0
        %v524 = vadd.f32 %v452, %v502
        %v525 = vadd.f32 %v453, %v522
        %s526 = scalar_lea.vmem %s1, 16
        %v527 = vld [vmem:[%s526] sm:$0xf]
        %v529 = vsel %vm265, %v527, 0
        %531 = vmatpush.msra.mxu0 0.0
        %532 = vmatpush.msra.mxu0 0.0
        %533 = vmatpush.msra.mxu0 0.0
        %534 = vmatpush.msra.mxu0 0.0
        %535 = vmatpush.msra.mxu0 0.0
        %536 = vmatpush.msra.mxu0 0.0
        %537 = vmatpush.msra.mxu0 0.0
        %538 = vmatpush.msra.mxu0 0.0
        %539 = vmatpush.msra.mxu0 0.0
        %540 = vmatpush.msra.mxu0 0.0
        %541 = vmatpush.msra.mxu0 0.0
        %542 = vmatpush.msra.mxu0 0.0
        %543 = vmatpush.msra.mxu0 0.0
        %544 = vmatpush.msra.mxu0 0.0
        %545 = vmatpush.msra.mxu0 %v227
        %546 = vmatpush.msra.mxu0 %v224
        %547 = vmatmul.f32.gmra.mxu0 %v529
        %v548 = vpop.f32.mrf.mxu0
        %v549 = vadd.f32 0.0, %v548
        %550 = vdwg.mxu0
        %551 = vmatpush.msra.mxu0 0.0
        %552 = vmatpush.msra.mxu0 0.0
        %553 = vmatpush.msra.mxu0 0.0
        %554 = vmatpush.msra.mxu0 0.0
        %555 = vmatpush.msra.mxu0 0.0
        %556 = vmatpush.msra.mxu0 0.0
        %557 = vmatpush.msra.mxu0 0.0
        %558 = vmatpush.msra.mxu0 0.0
        %559 = vmatpush.msra.mxu0 0.0
        %560 = vmatpush.msra.mxu0 0.0
        %561 = vmatpush.msra.mxu0 0.0
        %562 = vmatpush.msra.mxu0 0.0
        %563 = vmatpush.msra.mxu0 0.0
        %564 = vmatpush.msra.mxu0 0.0
        %565 = vmatpush.msra.mxu0 %v228
        %566 = vmatpush.msra.mxu0 %v225
        %567 = vmatmul.f32.gmra.mxu0 %v529
        %v568 = vpop.f32.mrf.mxu0
        %v569 = vadd.f32 0.0, %v568
        %570 = vdwg.mxu0
        %v571 = vadd.f32 %v524, %v549
        %v572 = vadd.f32 %v525, %v569
        %v573 = vld [vmem:[#allocation2 + $0x8] sm:$0xff]
        %v574 = vld [vmem:[#allocation2 + $0x10] sm:$0xff]
        %v575 = vld [vmem:[#allocation2 + $0x18] sm:$0xff]
        %v576 = vld [vmem:[#allocation2 + $0x28] sm:$0xff]
        %v577 = vld [vmem:[#allocation2 + $0x30] sm:$0xff]
        %v578 = vld [vmem:[#allocation2 + $0x38] sm:$0xff]
        %585 = vrot.lane.b32.xlu0 %v573, 127
        %v586 = vpop.permute.xlu0 %585
        %587 = vrot.lane.b32.xlu0 %v574, 127
        %v588 = vpop.permute.xlu0 %587
        %589 = vrot.lane.b32.xlu0 %v575, 127
        %v590 = vpop.permute.xlu0 %589
        %591 = vrot.lane.b32.xlu0 %v576, 127
        %v592 = vpop.permute.xlu0 %591
        %593 = vrot.lane.b32.xlu0 %v577, 127
        %v594 = vpop.permute.xlu0 %593
        %595 = vrot.lane.b32.xlu0 %v578, 127
        %v596 = vpop.permute.xlu0 %595
        %vm597 = vcmask 1039360
        %v598 = vsel %vm597, %v586, %v588
        %v599 = vsel %vm597, %v588, %v590
        %v600 = vsel %vm597, %v592, %v594
        %v601 = vsel %vm597, %v594, %v596
        %v606 = vsel %vm380, %v598, 0.0
        %v607 = vsel %vm381, %v599, 0.0
        %v608 = vsel %vm380, %v600, 0.0
        %v609 = vsel %vm381, %v601, 0.0
        %s610 = scalar_lea.vmem %s1, 20
        %v611 = vld [vmem:[%s610] sm:$0xf]
        %v613 = vsel %vm265, %v611, 0
        %615 = vmatpush.msra.mxu0 0.0
        %616 = vmatpush.msra.mxu0 0.0
        %617 = vmatpush.msra.mxu0 0.0
        %618 = vmatpush.msra.mxu0 0.0
        %619 = vmatpush.msra.mxu0 0.0
        %620 = vmatpush.msra.mxu0 0.0
        %621 = vmatpush.msra.mxu0 0.0
        %622 = vmatpush.msra.mxu0 0.0
        %623 = vmatpush.msra.mxu0 0.0
        %624 = vmatpush.msra.mxu0 0.0
        %625 = vmatpush.msra.mxu0 0.0
        %626 = vmatpush.msra.mxu0 0.0
        %627 = vmatpush.msra.mxu0 0.0
        %628 = vmatpush.msra.mxu0 0.0
        %629 = vmatpush.msra.mxu0 %v608
        %630 = vmatpush.msra.mxu0 %v606
        %631 = vmatmul.f32.gmra.mxu0 %v613
        %v632 = vpop.f32.mrf.mxu0
        %v633 = vadd.f32 0.0, %v632
        %634 = vdwg.mxu0
        %635 = vmatpush.msra.mxu0 0.0
        %636 = vmatpush.msra.mxu0 0.0
        %637 = vmatpush.msra.mxu0 0.0
        %638 = vmatpush.msra.mxu0 0.0
        %639 = vmatpush.msra.mxu0 0.0
        %640 = vmatpush.msra.mxu0 0.0
        %641 = vmatpush.msra.mxu0 0.0
        %642 = vmatpush.msra.mxu0 0.0
        %643 = vmatpush.msra.mxu0 0.0
        %644 = vmatpush.msra.mxu0 0.0
        %645 = vmatpush.msra.mxu0 0.0
        %646 = vmatpush.msra.mxu0 0.0
        %647 = vmatpush.msra.mxu0 0.0
        %648 = vmatpush.msra.mxu0 0.0
        %649 = vmatpush.msra.mxu0 %v609
        %650 = vmatpush.msra.mxu0 %v607
        %651 = vmatmul.f32.gmra.mxu0 %v613
        %v652 = vpop.f32.mrf.mxu0
        %v653 = vadd.f32 0.0, %v652
        %654 = vdwg.mxu0
        %v655 = vadd.f32 %v571, %v633
        %v656 = vadd.f32 %v572, %v653
        %657 = vrot.lane.b32.xlu0 %v573, 113
        %v658 = vpop.permute.xlu0 %657
        %659 = vrot.lane.b32.xlu0 %v574, 113
        %v660 = vpop.permute.xlu0 %659
        %661 = vrot.lane.b32.xlu0 %v575, 113
        %v662 = vpop.permute.xlu0 %661
        %663 = vrot.lane.b32.xlu0 %v576, 113
        %v664 = vpop.permute.xlu0 %663
        %665 = vrot.lane.b32.xlu0 %v577, 113
        %v666 = vpop.permute.xlu0 %665
        %667 = vrot.lane.b32.xlu0 %v578, 113
        %v668 = vpop.permute.xlu0 %667
        %vm669 = vcmask 924672
        %v670 = vsel %vm669, %v658, %v660
        %v671 = vsel %vm669, %v660, %v662
        %v672 = vsel %vm669, %v664, %v666
        %v673 = vsel %vm669, %v666, %v668
        %v678 = vsel %vm231, %v670, 0.0
        %v679 = vsel %vm232, %v671, 0.0
        %v680 = vsel %vm231, %v672, 0.0
        %v681 = vsel %vm232, %v673, 0.0
        %s682 = scalar_lea.vmem %s1, 24
        %v683 = vld [vmem:[%s682] sm:$0xf]
        %v685 = vsel %vm265, %v683, 0
        %687 = vmatpush.msra.mxu0 0.0
        %688 = vmatpush.msra.mxu0 0.0
        %689 = vmatpush.msra.mxu0 0.0
        %690 = vmatpush.msra.mxu0 0.0
        %691 = vmatpush.msra.mxu0 0.0
        %692 = vmatpush.msra.mxu0 0.0
        %693 = vmatpush.msra.mxu0 0.0
        %694 = vmatpush.msra.mxu0 0.0
        %695 = vmatpush.msra.mxu0 0.0
        %696 = vmatpush.msra.mxu0 0.0
        %697 = vmatpush.msra.mxu0 0.0
        %698 = vmatpush.msra.mxu0 0.0
        %699 = vmatpush.msra.mxu0 0.0
        %700 = vmatpush.msra.mxu0 0.0
        %701 = vmatpush.msra.mxu0 %v680
        %702 = vmatpush.msra.mxu0 %v678
        %703 = vmatmul.f32.gmra.mxu0 %v685
        %v704 = vpop.f32.mrf.mxu0
        %v705 = vadd.f32 0.0, %v704
        %706 = vdwg.mxu0
        %707 = vmatpush.msra.mxu0 0.0
        %708 = vmatpush.msra.mxu0 0.0
        %709 = vmatpush.msra.mxu0 0.0
        %710 = vmatpush.msra.mxu0 0.0
        %711 = vmatpush.msra.mxu0 0.0
        %712 = vmatpush.msra.mxu0 0.0
        %713 = vmatpush.msra.mxu0 0.0
        %714 = vmatpush.msra.mxu0 0.0
        %715 = vmatpush.msra.mxu0 0.0
        %716 = vmatpush.msra.mxu0 0.0
        %717 = vmatpush.msra.mxu0 0.0
        %718 = vmatpush.msra.mxu0 0.0
        %719 = vmatpush.msra.mxu0 0.0
        %720 = vmatpush.msra.mxu0 0.0
        %721 = vmatpush.msra.mxu0 %v681
        %722 = vmatpush.msra.mxu0 %v679
        %723 = vmatmul.f32.gmra.mxu0 %v685
        %v724 = vpop.f32.mrf.mxu0
        %v725 = vadd.f32 0.0, %v724
        %726 = vdwg.mxu0
        %v727 = vadd.f32 %v655, %v705
        %v728 = vadd.f32 %v656, %v725
        %s729 = scalar_lea.vmem %s1, 28
        %v730 = vld [vmem:[%s729] sm:$0xf]
        %731 = vrot.lane.b32.xlu0 %v573, 112
        %v732 = vpop.permute.xlu0 %731
        %733 = vrot.lane.b32.xlu0 %v574, 112
        %v734 = vpop.permute.xlu0 %733
        %735 = vrot.lane.b32.xlu0 %v575, 112
        %v736 = vpop.permute.xlu0 %735
        %737 = vrot.lane.b32.xlu0 %v576, 112
        %v738 = vpop.permute.xlu0 %737
        %739 = vrot.lane.b32.xlu0 %v577, 112
        %v740 = vpop.permute.xlu0 %739
        %741 = vrot.lane.b32.xlu0 %v578, 112
        %v742 = vpop.permute.xlu0 %741
        %vm743 = vcmask 916480
        %v744 = vsel %vm743, %v732, %v734
        %v745 = vsel %vm743, %v734, %v736
        %v746 = vsel %vm743, %v738, %v740
        %v747 = vsel %vm743, %v740, %v742
        %v753 = vsel %vm265, %v730, 0
        %755 = vmatpush.msra.mxu0 0.0
        %756 = vmatpush.msra.mxu0 0.0
        %757 = vmatpush.msra.mxu0 0.0
        %758 = vmatpush.msra.mxu0 0.0
        %759 = vmatpush.msra.mxu0 0.0
        %760 = vmatpush.msra.mxu0 0.0
        %761 = vmatpush.msra.mxu0 0.0
        %762 = vmatpush.msra.mxu0 0.0
        %763 = vmatpush.msra.mxu0 0.0
        %764 = vmatpush.msra.mxu0 0.0
        %765 = vmatpush.msra.mxu0 0.0
        %766 = vmatpush.msra.mxu0 0.0
        %767 = vmatpush.msra.mxu0 0.0
        %768 = vmatpush.msra.mxu0 0.0
        %769 = vmatpush.msra.mxu0 %v746
        %770 = vmatpush.msra.mxu0 %v744
        %771 = vmatmul.f32.gmra.mxu0 %v753
        %v772 = vpop.f32.mrf.mxu0
        %v773 = vadd.f32 0.0, %v772
        %774 = vdwg.mxu0
        %775 = vmatpush.msra.mxu0 0.0
        %776 = vmatpush.msra.mxu0 0.0
        %777 = vmatpush.msra.mxu0 0.0
        %778 = vmatpush.msra.mxu0 0.0
        %779 = vmatpush.msra.mxu0 0.0
        %780 = vmatpush.msra.mxu0 0.0
        %781 = vmatpush.msra.mxu0 0.0
        %782 = vmatpush.msra.mxu0 0.0
        %783 = vmatpush.msra.mxu0 0.0
        %784 = vmatpush.msra.mxu0 0.0
        %785 = vmatpush.msra.mxu0 0.0
        %786 = vmatpush.msra.mxu0 0.0
        %787 = vmatpush.msra.mxu0 0.0
        %788 = vmatpush.msra.mxu0 0.0
        %789 = vmatpush.msra.mxu0 %v747
        %790 = vmatpush.msra.mxu0 %v745
        %791 = vmatmul.f32.gmra.mxu0 %v753
        %v792 = vpop.f32.mrf.mxu0
        %v793 = vadd.f32 0.0, %v792
        %794 = vdwg.mxu0
        %v795 = vadd.f32 %v727, %v773
        %v796 = vadd.f32 %v728, %v793
        %797 = vrot.lane.b32.xlu0 %v573, 111
        %v798 = vpop.permute.xlu0 %797
        %799 = vrot.lane.b32.xlu0 %v574, 111
        %v800 = vpop.permute.xlu0 %799
        %801 = vrot.lane.b32.xlu0 %v575, 111
        %v802 = vpop.permute.xlu0 %801
        %803 = vrot.lane.b32.xlu0 %v576, 111
        %v804 = vpop.permute.xlu0 %803
        %805 = vrot.lane.b32.xlu0 %v577, 111
        %v806 = vpop.permute.xlu0 %805
        %807 = vrot.lane.b32.xlu0 %v578, 111
        %v808 = vpop.permute.xlu0 %807
        %vm809 = vcmask 908288
        %v810 = vsel %vm809, %v798, %v800
        %v811 = vsel %vm809, %v800, %v802
        %v812 = vsel %vm809, %v804, %v806
        %v813 = vsel %vm809, %v806, %v808
        %v818 = vsel %vm380, %v810, 0.0
        %v819 = vsel %vm381, %v811, 0.0
        %v820 = vsel %vm380, %v812, 0.0
        %v821 = vsel %vm381, %v813, 0.0
        %s822 = scalar_lea.vmem %s1, 32
        %v823 = vld [vmem:[%s822] sm:$0xf]
        %v825 = vsel %vm265, %v823, 0
        %827 = vmatpush.msra.mxu0 0.0
        %828 = vmatpush.msra.mxu0 0.0
        %829 = vmatpush.msra.mxu0 0.0
        %830 = vmatpush.msra.mxu0 0.0
        %831 = vmatpush.msra.mxu0 0.0
        %832 = vmatpush.msra.mxu0 0.0
        %833 = vmatpush.msra.mxu0 0.0
        %834 = vmatpush.msra.mxu0 0.0
        %835 = vmatpush.msra.mxu0 0.0
        %836 = vmatpush.msra.mxu0 0.0
        %837 = vmatpush.msra.mxu0 0.0
        %838 = vmatpush.msra.mxu0 0.0
        %839 = vmatpush.msra.mxu0 0.0
        %840 = vmatpush.msra.mxu0 0.0
        %841 = vmatpush.msra.mxu0 %v820
        %842 = vmatpush.msra.mxu0 %v818
        %843 = vmatmul.f32.gmra.mxu0 %v825
        %v844 = vpop.f32.mrf.mxu0
        %v845 = vadd.f32 0.0, %v844
        %846 = vdwg.mxu0
        %847 = vmatpush.msra.mxu0 0.0
        %848 = vmatpush.msra.mxu0 0.0
        %849 = vmatpush.msra.mxu0 0.0
        %850 = vmatpush.msra.mxu0 0.0
        %851 = vmatpush.msra.mxu0 0.0
        %852 = vmatpush.msra.mxu0 0.0
        %853 = vmatpush.msra.mxu0 0.0
        %854 = vmatpush.msra.mxu0 0.0
        %855 = vmatpush.msra.mxu0 0.0
        %856 = vmatpush.msra.mxu0 0.0
        %857 = vmatpush.msra.mxu0 0.0
        %858 = vmatpush.msra.mxu0 0.0
        %859 = vmatpush.msra.mxu0 0.0
        %860 = vmatpush.msra.mxu0 0.0
        %861 = vmatpush.msra.mxu0 %v821
        %862 = vmatpush.msra.mxu0 %v819
        %863 = vmatmul.f32.gmra.mxu0 %v825
        %v864 = vpop.f32.mrf.mxu0
        %v865 = vadd.f32 0.0, %v864
        %866 = vdwg.mxu0
        %v867 = vadd.f32 %v795, %v845
        %v868 = vadd.f32 %v796, %v865
        %v869 = vmax.f32 %v867, 0.0
        %v870 = vmax.f32 %v868, 0.0
        %v873 = vrot.slane %v869, 4
        %v874 = vrot.slane %v870, 4
        %877 = vst [vmem:[#allocation2 + $0x8] sm:$0xf0] %v873
        %878 = vst [vmem:[#allocation2 + $0x10] sm:$0xf0] %v874
        %s879 = scalar_lea.vmem %s2, 4
        %v880 = vld [vmem:[%s879] sm:$0xf]
        %882 = vset.pattern.permute.xlu0 0
        %883 = vperm.xlu0 %882, %v880
        %v884 = vpop.permute.xlu0 %883
        %v886 = vld [vmem:[#allocation2] sm:$0xff]
        %v887 = vld [vmem:[#allocation2 + $0x8] sm:$0xff]
        %v888 = vld [vmem:[#allocation2 + $0x10] sm:$0xff]
        %v889 = vld [vmem:[#allocation2 + $0x20] sm:$0xff]
        %v890 = vld [vmem:[#allocation2 + $0x28] sm:$0xff]
        %v891 = vld [vmem:[#allocation2 + $0x30] sm:$0xff]
        %898 = vrot.lane.b32.xlu0 %v886, 17
        %v899 = vpop.permute.xlu0 %898
        %900 = vrot.lane.b32.xlu0 %v887, 17
        %v901 = vpop.permute.xlu0 %900
        %902 = vrot.lane.b32.xlu0 %v888, 17
        %v903 = vpop.permute.xlu0 %902
        %904 = vrot.lane.b32.xlu0 %v889, 17
        %v905 = vpop.permute.xlu0 %904
        %906 = vrot.lane.b32.xlu0 %v890, 17
        %v907 = vpop.permute.xlu0 %906
        %908 = vrot.lane.b32.xlu0 %v891, 17
        %v909 = vpop.permute.xlu0 %908
        %v910 = vsel %vm251, %v899, %v901
        %v911 = vsel %vm251, %v901, %v903
        %v912 = vsel %vm251, %v905, %v907
        %v913 = vsel %vm251, %v907, %v909
        %v918 = vsel %vm231, %v910, 0.0
        %v919 = vsel %vm232, %v911, 0.0
        %v920 = vsel %vm231, %v912, 0.0
        %v921 = vsel %vm232, %v913, 0.0
        %s922 = scalar_lea.vmem %s1, 36
        %v923 = vld [vmem:[%s922] sm:$0xf]
        %v925 = vsel %vm265, %v923, 0
        %927 = vmatpush.msra.mxu0 0.0
        %928 = vmatpush.msra.mxu0 0.0
        %929 = vmatpush.msra.mxu0 0.0
        %930 = vmatpush.msra.mxu0 0.0
        %931 = vmatpush.msra.mxu0 0.0
        %932 = vmatpush.msra.mxu0 0.0
        %933 = vmatpush.msra.mxu0 0.0
        %934 = vmatpush.msra.mxu0 0.0
        %935 = vmatpush.msra.mxu0 0.0
        %936 = vmatpush.msra.mxu0 0.0
        %937 = vmatpush.msra.mxu0 0.0
        %938 = vmatpush.msra.mxu0 0.0
        %939 = vmatpush.msra.mxu0 0.0
        %940 = vmatpush.msra.mxu0 0.0
        %941 = vmatpush.msra.mxu0 %v920
        %942 = vmatpush.msra.mxu0 %v918
        %943 = vmatmul.f32.gmra.mxu0 %v925
        %v944 = vpop.f32.mrf.mxu0
        %v945 = vadd.f32 0.0, %v944
        %946 = vdwg.mxu0
        %947 = vmatpush.msra.mxu0 0.0
        %948 = vmatpush.msra.mxu0 0.0
        %949 = vmatpush.msra.mxu0 0.0
        %950 = vmatpush.msra.mxu0 0.0
        %951 = vmatpush.msra.mxu0 0.0
        %952 = vmatpush.msra.mxu0 0.0
        %953 = vmatpush.msra.mxu0 0.0
        %954 = vmatpush.msra.mxu0 0.0
        %955 = vmatpush.msra.mxu0 0.0
        %956 = vmatpush.msra.mxu0 0.0
        %957 = vmatpush.msra.mxu0 0.0
        %958 = vmatpush.msra.mxu0 0.0
        %959 = vmatpush.msra.mxu0 0.0
        %960 = vmatpush.msra.mxu0 0.0
        %961 = vmatpush.msra.mxu0 %v921
        %962 = vmatpush.msra.mxu0 %v919
        %963 = vmatmul.f32.gmra.mxu0 %v925
        %v964 = vpop.f32.mrf.mxu0
        %v965 = vadd.f32 0.0, %v964
        %966 = vdwg.mxu0
        %v967 = vadd.f32 %v884, %v945
        %v968 = vadd.f32 %v884, %v965
        %s969 = scalar_lea.vmem %s1, 40
        %v970 = vld [vmem:[%s969] sm:$0xf]
        %971 = vrot.lane.b32.xlu0 %v886, 16
        %v972 = vpop.permute.xlu0 %971
        %973 = vrot.lane.b32.xlu0 %v887, 16
        %v974 = vpop.permute.xlu0 %973
        %975 = vrot.lane.b32.xlu0 %v888, 16
        %v976 = vpop.permute.xlu0 %975
        %977 = vrot.lane.b32.xlu0 %v889, 16
        %v978 = vpop.permute.xlu0 %977
        %979 = vrot.lane.b32.xlu0 %v890, 16
        %v980 = vpop.permute.xlu0 %979
        %981 = vrot.lane.b32.xlu0 %v891, 16
        %v982 = vpop.permute.xlu0 %981
        %v983 = vsel %vm265, %v972, %v974
        %v984 = vsel %vm265, %v974, %v976
        %v985 = vsel %vm265, %v978, %v980
        %v986 = vsel %vm265, %v980, %v982
        %v992 = vsel %vm265, %v970, 0
        %994 = vmatpush.msra.mxu0 0.0
        %995 = vmatpush.msra.mxu0 0.0
        %996 = vmatpush.msra.mxu0 0.0
        %997 = vmatpush.msra.mxu0 0.0
        %998 = vmatpush.msra.mxu0 0.0
        %999 = vmatpush.msra.mxu0 0.0
        %1000 = vmatpush.msra.mxu0 0.0
        %1001 = vmatpush.msra.mxu0 0.0
        %1002 = vmatpush.msra.mxu0 0.0
        %1003 = vmatpush.msra.mxu0 0.0
        %1004 = vmatpush.msra.mxu0 0.0
        %1005 = vmatpush.msra.mxu0 0.0
        %1006 = vmatpush.msra.mxu0 0.0
        %1007 = vmatpush.msra.mxu0 0.0
        %1008 = vmatpush.msra.mxu0 %v985
        %1009 = vmatpush.msra.mxu0 %v983
        %1010 = vmatmul.f32.gmra.mxu0 %v992
        %v1011 = vpop.f32.mrf.mxu0
        %v1012 = vadd.f32 0.0, %v1011
        %1013 = vdwg.mxu0
        %1014 = vmatpush.msra.mxu0 0.0
        %1015 = vmatpush.msra.mxu0 0.0
        %1016 = vmatpush.msra.mxu0 0.0
        %1017 = vmatpush.msra.mxu0 0.0
        %1018 = vmatpush.msra.mxu0 0.0
        %1019 = vmatpush.msra.mxu0 0.0
        %1020 = vmatpush.msra.mxu0 0.0
        %1021 = vmatpush.msra.mxu0 0.0
        %1022 = vmatpush.msra.mxu0 0.0
        %1023 = vmatpush.msra.mxu0 0.0
        %1024 = vmatpush.msra.mxu0 0.0
        %1025 = vmatpush.msra.mxu0 0.0
        %1026 = vmatpush.msra.mxu0 0.0
        %1027 = vmatpush.msra.mxu0 0.0
        %1028 = vmatpush.msra.mxu0 %v986
        %1029 = vmatpush.msra.mxu0 %v984
        %1030 = vmatmul.f32.gmra.mxu0 %v992
        %v1031 = vpop.f32.mrf.mxu0
        %v1032 = vadd.f32 0.0, %v1031
        %1033 = vdwg.mxu0
        %v1034 = vadd.f32 %v967, %v1012
        %v1035 = vadd.f32 %v968, %v1032
        %1036 = vrot.lane.b32.xlu0 %v886, 15
        %v1037 = vpop.permute.xlu0 %1036
        %1038 = vrot.lane.b32.xlu0 %v887, 15
        %v1039 = vpop.permute.xlu0 %1038
        %1040 = vrot.lane.b32.xlu0 %v888, 15
        %v1041 = vpop.permute.xlu0 %1040
        %1042 = vrot.lane.b32.xlu0 %v889, 15
        %v1043 = vpop.permute.xlu0 %1042
        %1044 = vrot.lane.b32.xlu0 %v890, 15
        %v1045 = vpop.permute.xlu0 %1044
        %1046 = vrot.lane.b32.xlu0 %v891, 15
        %v1047 = vpop.permute.xlu0 %1046
        %v1048 = vsel %vm394, %v1037, %v1039
        %v1049 = vsel %vm394, %v1039, %v1041
        %v1050 = vsel %vm394, %v1043, %v1045
        %v1051 = vsel %vm394, %v1045, %v1047
        %v1056 = vsel %vm380, %v1048, 0.0
        %v1057 = vsel %vm381, %v1049, 0.0
        %v1058 = vsel %vm380, %v1050, 0.0
        %v1059 = vsel %vm381, %v1051, 0.0
        %s1060 = scalar_lea.vmem %s1, 44
        %v1061 = vld [vmem:[%s1060] sm:$0xf]
        %v1063 = vsel %vm265, %v1061, 0
        %1065 = vmatpush.msra.mxu0 0.0
        %1066 = vmatpush.msra.mxu0 0.0
        %1067 = vmatpush.msra.mxu0 0.0
        %1068 = vmatpush.msra.mxu0 0.0
        %1069 = vmatpush.msra.mxu0 0.0
        %1070 = vmatpush.msra.mxu0 0.0
        %1071 = vmatpush.msra.mxu0 0.0
        %1072 = vmatpush.msra.mxu0 0.0
        %1073 = vmatpush.msra.mxu0 0.0
        %1074 = vmatpush.msra.mxu0 0.0
        %1075 = vmatpush.msra.mxu0 0.0
        %1076 = vmatpush.msra.mxu0 0.0
        %1077 = vmatpush.msra.mxu0 0.0
        %1078 = vmatpush.msra.mxu0 0.0
        %1079 = vmatpush.msra.mxu0 %v1058
        %1080 = vmatpush.msra.mxu0 %v1056
        %1081 = vmatmul.f32.gmra.mxu0 %v1063
        %v1082 = vpop.f32.mrf.mxu0
        %v1083 = vadd.f32 0.0, %v1082
        %1084 = vdwg.mxu0
        %1085 = vmatpush.msra.mxu0 0.0
        %1086 = vmatpush.msra.mxu0 0.0
        %1087 = vmatpush.msra.mxu0 0.0
        %1088 = vmatpush.msra.mxu0 0.0
        %1089 = vmatpush.msra.mxu0 0.0
        %1090 = vmatpush.msra.mxu0 0.0
        %1091 = vmatpush.msra.mxu0 0.0
        %1092 = vmatpush.msra.mxu0 0.0
        %1093 = vmatpush.msra.mxu0 0.0
        %1094 = vmatpush.msra.mxu0 0.0
        %1095 = vmatpush.msra.mxu0 0.0
        %1096 = vmatpush.msra.mxu0 0.0
        %1097 = vmatpush.msra.mxu0 0.0
        %1098 = vmatpush.msra.mxu0 0.0
        %1099 = vmatpush.msra.mxu0 %v1059
        %1100 = vmatpush.msra.mxu0 %v1057
        %1101 = vmatmul.f32.gmra.mxu0 %v1063
        %v1102 = vpop.f32.mrf.mxu0
        %v1103 = vadd.f32 0.0, %v1102
        %1104 = vdwg.mxu0
        %v1105 = vadd.f32 %v1034, %v1083
        %v1106 = vadd.f32 %v1035, %v1103
        %1107 = vrot.lane.b32.xlu0 %v886, 1
        %v1108 = vpop.permute.xlu0 %1107
        %1109 = vrot.lane.b32.xlu0 %v887, 1
        %v1110 = vpop.permute.xlu0 %1109
        %1111 = vrot.lane.b32.xlu0 %v888, 1
        %v1112 = vpop.permute.xlu0 %1111
        %1113 = vrot.lane.b32.xlu0 %v889, 1
        %v1114 = vpop.permute.xlu0 %1113
        %1115 = vrot.lane.b32.xlu0 %v890, 1
        %v1116 = vpop.permute.xlu0 %1115
        %1117 = vrot.lane.b32.xlu0 %v891, 1
        %v1118 = vpop.permute.xlu0 %1117
        %v1119 = vsel %vm466, %v1108, %v1110
        %v1120 = vsel %vm466, %v1110, %v1112
        %v1121 = vsel %vm466, %v1114, %v1116
        %v1122 = vsel %vm466, %v1116, %v1118
        %v1127 = vsel %vm231, %v1119, 0.0
        %v1128 = vsel %vm232, %v1120, 0.0
        %v1129 = vsel %vm231, %v1121, 0.0
        %v1130 = vsel %vm232, %v1122, 0.0
        %s1131 = scalar_lea.vmem %s1, 48
        %v1132 = vld [vmem:[%s1131] sm:$0xf]
        %v1134 = vsel %vm265, %v1132, 0
        %1136 = vmatpush.msra.mxu0 0.0
        %1137 = vmatpush.msra.mxu0 0.0
        %1138 = vmatpush.msra.mxu0 0.0
        %1139 = vmatpush.msra.mxu0 0.0
        %1140 = vmatpush.msra.mxu0 0.0
        %1141 = vmatpush.msra.mxu0 0.0
        %1142 = vmatpush.msra.mxu0 0.0
        %1143 = vmatpush.msra.mxu0 0.0
        %1144 = vmatpush.msra.mxu0 0.0
        %1145 = vmatpush.msra.mxu0 0.0
        %1146 = vmatpush.msra.mxu0 0.0
        %1147 = vmatpush.msra.mxu0 0.0
        %1148 = vmatpush.msra.mxu0 0.0
        %1149 = vmatpush.msra.mxu0 0.0
        %1150 = vmatpush.msra.mxu0 %v1129
        %1151 = vmatpush.msra.mxu0 %v1127
        %1152 = vmatmul.f32.gmra.mxu0 %v1134
        %v1153 = vpop.f32.mrf.mxu0
        %v1154 = vadd.f32 0.0, %v1153
        %1155 = vdwg.mxu0
        %1156 = vmatpush.msra.mxu0 0.0
        %1157 = vmatpush.msra.mxu0 0.0
        %1158 = vmatpush.msra.mxu0 0.0
        %1159 = vmatpush.msra.mxu0 0.0
        %1160 = vmatpush.msra.mxu0 0.0
        %1161 = vmatpush.msra.mxu0 0.0
        %1162 = vmatpush.msra.mxu0 0.0
        %1163 = vmatpush.msra.mxu0 0.0
        %1164 = vmatpush.msra.mxu0 0.0
        %1165 = vmatpush.msra.mxu0 0.0
        %1166 = vmatpush.msra.mxu0 0.0
        %1167 = vmatpush.msra.mxu0 0.0
        %1168 = vmatpush.msra.mxu0 0.0
        %1169 = vmatpush.msra.mxu0 0.0
        %1170 = vmatpush.msra.mxu0 %v1130
        %1171 = vmatpush.msra.mxu0 %v1128
        %1172 = vmatmul.f32.gmra.mxu0 %v1134
        %v1173 = vpop.f32.mrf.mxu0
        %v1174 = vadd.f32 0.0, %v1173
        %1175 = vdwg.mxu0
        %v1176 = vadd.f32 %v1105, %v1154
        %v1177 = vadd.f32 %v1106, %v1174
        %s1178 = scalar_lea.vmem %s1, 52
        %v1179 = vld [vmem:[%s1178] sm:$0xf]
        %v1181 = vsel %vm265, %v1179, 0
        %1183 = vmatpush.msra.mxu0 0.0
        %1184 = vmatpush.msra.mxu0 0.0
        %1185 = vmatpush.msra.mxu0 0.0
        %1186 = vmatpush.msra.mxu0 0.0
        %1187 = vmatpush.msra.mxu0 0.0
        %1188 = vmatpush.msra.mxu0 0.0
        %1189 = vmatpush.msra.mxu0 0.0
        %1190 = vmatpush.msra.mxu0 0.0
        %1191 = vmatpush.msra.mxu0 0.0
        %1192 = vmatpush.msra.mxu0 0.0
        %1193 = vmatpush.msra.mxu0 0.0
        %1194 = vmatpush.msra.mxu0 0.0
        %1195 = vmatpush.msra.mxu0 0.0
        %1196 = vmatpush.msra.mxu0 0.0
        %1197 = vmatpush.msra.mxu0 %v890
        %1198 = vmatpush.msra.mxu0 %v887
        %1199 = vmatmul.f32.gmra.mxu0 %v1181
        %v1200 = vpop.f32.mrf.mxu0
        %v1201 = vadd.f32 0.0, %v1200
        %1202 = vdwg.mxu0
        %1203 = vmatpush.msra.mxu0 0.0
        %1204 = vmatpush.msra.mxu0 0.0
        %1205 = vmatpush.msra.mxu0 0.0
        %1206 = vmatpush.msra.mxu0 0.0
        %1207 = vmatpush.msra.mxu0 0.0
        %1208 = vmatpush.msra.mxu0 0.0
        %1209 = vmatpush.msra.mxu0 0.0
        %1210 = vmatpush.msra.mxu0 0.0
        %1211 = vmatpush.msra.mxu0 0.0
        %1212 = vmatpush.msra.mxu0 0.0
        %1213 = vmatpush.msra.mxu0 0.0
        %1214 = vmatpush.msra.mxu0 0.0
        %1215 = vmatpush.msra.mxu0 0.0
        %1216 = vmatpush.msra.mxu0 0.0
        %1217 = vmatpush.msra.mxu0 %v891
        %1218 = vmatpush.msra.mxu0 %v888
        %1219 = vmatmul.f32.gmra.mxu0 %v1181
        %v1220 = vpop.f32.mrf.mxu0
        %v1221 = vadd.f32 0.0, %v1220
        %1222 = vdwg.mxu0
        %v1223 = vadd.f32 %v1176, %v1201
        %v1224 = vadd.f32 %v1177, %v1221
        %v1225 = vld [vmem:[#allocation2 + $0x8] sm:$0xff]
        %v1226 = vld [vmem:[#allocation2 + $0x10] sm:$0xff]
        %v1227 = vld [vmem:[#allocation2 + $0x18] sm:$0xff]
        %v1228 = vld [vmem:[#allocation2 + $0x28] sm:$0xff]
        %v1229 = vld [vmem:[#allocation2 + $0x30] sm:$0xff]
        %v1230 = vld [vmem:[#allocation2 + $0x38] sm:$0xff]
        %1237 = vrot.lane.b32.xlu0 %v1225, 127
        %v1238 = vpop.permute.xlu0 %1237
        %1239 = vrot.lane.b32.xlu0 %v1226, 127
        %v1240 = vpop.permute.xlu0 %1239
        %1241 = vrot.lane.b32.xlu0 %v1227, 127
        %v1242 = vpop.permute.xlu0 %1241
        %1243 = vrot.lane.b32.xlu0 %v1228, 127
        %v1244 = vpop.permute.xlu0 %1243
        %1245 = vrot.lane.b32.xlu0 %v1229, 127
        %v1246 = vpop.permute.xlu0 %1245
        %1247 = vrot.lane.b32.xlu0 %v1230, 127
        %v1248 = vpop.permute.xlu0 %1247
        %v1249 = vsel %vm597, %v1238, %v1240
        %v1250 = vsel %vm597, %v1240, %v1242
        %v1251 = vsel %vm597, %v1244, %v1246
        %v1252 = vsel %vm597, %v1246, %v1248
        %v1257 = vsel %vm380, %v1249, 0.0
        %v1258 = vsel %vm381, %v1250, 0.0
        %v1259 = vsel %vm380, %v1251, 0.0
        %v1260 = vsel %vm381, %v1252, 0.0
        %s1261 = scalar_lea.vmem %s1, 56
        %v1262 = vld [vmem:[%s1261] sm:$0xf]
        %v1264 = vsel %vm265, %v1262, 0
        %1266 = vmatpush.msra.mxu0 0.0
        %1267 = vmatpush.msra.mxu0 0.0
        %1268 = vmatpush.msra.mxu0 0.0
        %1269 = vmatpush.msra.mxu0 0.0
        %1270 = vmatpush.msra.mxu0 0.0
        %1271 = vmatpush.msra.mxu0 0.0
        %1272 = vmatpush.msra.mxu0 0.0
        %1273 = vmatpush.msra.mxu0 0.0
        %1274 = vmatpush.msra.mxu0 0.0
        %1275 = vmatpush.msra.mxu0 0.0
        %1276 = vmatpush.msra.mxu0 0.0
        %1277 = vmatpush.msra.mxu0 0.0
        %1278 = vmatpush.msra.mxu0 0.0
        %1279 = vmatpush.msra.mxu0 0.0
        %1280 = vmatpush.msra.mxu0 %v1259
        %1281 = vmatpush.msra.mxu0 %v1257
        %1282 = vmatmul.f32.gmra.mxu0 %v1264
        %v1283 = vpop.f32.mrf.mxu0
        %v1284 = vadd.f32 0.0, %v1283
        %1285 = vdwg.mxu0
        %1286 = vmatpush.msra.mxu0 0.0
        %1287 = vmatpush.msra.mxu0 0.0
        %1288 = vmatpush.msra.mxu0 0.0
        %1289 = vmatpush.msra.mxu0 0.0
        %1290 = vmatpush.msra.mxu0 0.0
        %1291 = vmatpush.msra.mxu0 0.0
        %1292 = vmatpush.msra.mxu0 0.0
        %1293 = vmatpush.msra.mxu0 0.0
        %1294 = vmatpush.msra.mxu0 0.0
        %1295 = vmatpush.msra.mxu0 0.0
        %1296 = vmatpush.msra.mxu0 0.0
        %1297 = vmatpush.msra.mxu0 0.0
        %1298 = vmatpush.msra.mxu0 0.0
        %1299 = vmatpush.msra.mxu0 0.0
        %1300 = vmatpush.msra.mxu0 %v1260
        %1301 = vmatpush.msra.mxu0 %v1258
        %1302 = vmatmul.f32.gmra.mxu0 %v1264
        %v1303 = vpop.f32.mrf.mxu0
        %v1304 = vadd.f32 0.0, %v1303
        %1305 = vdwg.mxu0
        %v1306 = vadd.f32 %v1223, %v1284
        %v1307 = vadd.f32 %v1224, %v1304
        %1308 = vrot.lane.b32.xlu0 %v1225, 113
        %v1309 = vpop.permute.xlu0 %1308
        %1310 = vrot.lane.b32.xlu0 %v1226, 113
        %v1311 = vpop.permute.xlu0 %1310
        %1312 = vrot.lane.b32.xlu0 %v1227, 113
        %v1313 = vpop.permute.xlu0 %1312
        %1314 = vrot.lane.b32.xlu0 %v1228, 113
        %v1315 = vpop.permute.xlu0 %1314
        %1316 = vrot.lane.b32.xlu0 %v1229, 113
        %v1317 = vpop.permute.xlu0 %1316
        %1318 = vrot.lane.b32.xlu0 %v1230, 113
        %v1319 = vpop.permute.xlu0 %1318
        %v1320 = vsel %vm669, %v1309, %v1311
        %v1321 = vsel %vm669, %v1311, %v1313
        %v1322 = vsel %vm669, %v1315, %v1317
        %v1323 = vsel %vm669, %v1317, %v1319
        %v1328 = vsel %vm231, %v1320, 0.0
        %v1329 = vsel %vm232, %v1321, 0.0
        %v1330 = vsel %vm231, %v1322, 0.0
        %v1331 = vsel %vm232, %v1323, 0.0
        %s1332 = scalar_lea.vmem %s1, 60
        %v1333 = vld [vmem:[%s1332] sm:$0xf]
        %v1335 = vsel %vm265, %v1333, 0
        %1337 = vmatpush.msra.mxu0 0.0
        %1338 = vmatpush.msra.mxu0 0.0
        %1339 = vmatpush.msra.mxu0 0.0
        %1340 = vmatpush.msra.mxu0 0.0
        %1341 = vmatpush.msra.mxu0 0.0
        %1342 = vmatpush.msra.mxu0 0.0
        %1343 = vmatpush.msra.mxu0 0.0
        %1344 = vmatpush.msra.mxu0 0.0
        %1345 = vmatpush.msra.mxu0 0.0
        %1346 = vmatpush.msra.mxu0 0.0
        %1347 = vmatpush.msra.mxu0 0.0
        %1348 = vmatpush.msra.mxu0 0.0
        %1349 = vmatpush.msra.mxu0 0.0
        %1350 = vmatpush.msra.mxu0 0.0
        %1351 = vmatpush.msra.mxu0 %v1330
        %1352 = vmatpush.msra.mxu0 %v1328
        %1353 = vmatmul.f32.gmra.mxu0 %v1335
        %v1354 = vpop.f32.mrf.mxu0
        %v1355 = vadd.f32 0.0, %v1354
        %1356 = vdwg.mxu0
        %1357 = vmatpush.msra.mxu0 0.0
        %1358 = vmatpush.msra.mxu0 0.0
        %1359 = vmatpush.msra.mxu0 0.0
        %1360 = vmatpush.msra.mxu0 0.0
        %1361 = vmatpush.msra.mxu0 0.0
        %1362 = vmatpush.msra.mxu0 0.0
        %1363 = vmatpush.msra.mxu0 0.0
        %1364 = vmatpush.msra.mxu0 0.0
        %1365 = vmatpush.msra.mxu0 0.0
        %1366 = vmatpush.msra.mxu0 0.0
        %1367 = vmatpush.msra.mxu0 0.0
        %1368 = vmatpush.msra.mxu0 0.0
        %1369 = vmatpush.msra.mxu0 0.0
        %1370 = vmatpush.msra.mxu0 0.0
        %1371 = vmatpush.msra.mxu0 %v1331
        %1372 = vmatpush.msra.mxu0 %v1329
        %1373 = vmatmul.f32.gmra.mxu0 %v1335
        %v1374 = vpop.f32.mrf.mxu0
        %v1375 = vadd.f32 0.0, %v1374
        %1376 = vdwg.mxu0
        %v1377 = vadd.f32 %v1306, %v1355
        %v1378 = vadd.f32 %v1307, %v1375
        %s1379 = scalar_lea.vmem %s1, 64
        %v1380 = vld [vmem:[%s1379] sm:$0xf]
        %1381 = vrot.lane.b32.xlu0 %v1225, 112
        %v1382 = vpop.permute.xlu0 %1381
        %1383 = vrot.lane.b32.xlu0 %v1226, 112
        %v1384 = vpop.permute.xlu0 %1383
        %1385 = vrot.lane.b32.xlu0 %v1227, 112
        %v1386 = vpop.permute.xlu0 %1385
        %1387 = vrot.lane.b32.xlu0 %v1228, 112
        %v1388 = vpop.permute.xlu0 %1387
        %1389 = vrot.lane.b32.xlu0 %v1229, 112
        %v1390 = vpop.permute.xlu0 %1389
        %1391 = vrot.lane.b32.xlu0 %v1230, 112
        %v1392 = vpop.permute.xlu0 %1391
        %v1393 = vsel %vm743, %v1382, %v1384
        %v1394 = vsel %vm743, %v1384, %v1386
        %v1395 = vsel %vm743, %v1388, %v1390
        %v1396 = vsel %vm743, %v1390, %v1392
        %v1402 = vsel %vm265, %v1380, 0
        %1404 = vmatpush.msra.mxu0 0.0
        %1405 = vmatpush.msra.mxu0 0.0
        %1406 = vmatpush.msra.mxu0 0.0
        %1407 = vmatpush.msra.mxu0 0.0
        %1408 = vmatpush.msra.mxu0 0.0
        %1409 = vmatpush.msra.mxu0 0.0
        %1410 = vmatpush.msra.mxu0 0.0
        %1411 = vmatpush.msra.mxu0 0.0
        %1412 = vmatpush.msra.mxu0 0.0
        %1413 = vmatpush.msra.mxu0 0.0
        %1414 = vmatpush.msra.mxu0 0.0
        %1415 = vmatpush.msra.mxu0 0.0
        %1416 = vmatpush.msra.mxu0 0.0
        %1417 = vmatpush.msra.mxu0 0.0
        %1418 = vmatpush.msra.mxu0 %v1395
        %1419 = vmatpush.msra.mxu0 %v1393
        %1420 = vmatmul.f32.gmra.mxu0 %v1402
        %v1421 = vpop.f32.mrf.mxu0
        %v1422 = vadd.f32 0.0, %v1421
        %1423 = vdwg.mxu0
        %1424 = vmatpush.msra.mxu0 0.0
        %1425 = vmatpush.msra.mxu0 0.0
        %1426 = vmatpush.msra.mxu0 0.0
        %1427 = vmatpush.msra.mxu0 0.0
        %1428 = vmatpush.msra.mxu0 0.0
        %1429 = vmatpush.msra.mxu0 0.0
        %1430 = vmatpush.msra.mxu0 0.0
        %1431 = vmatpush.msra.mxu0 0.0
        %1432 = vmatpush.msra.mxu0 0.0
        %1433 = vmatpush.msra.mxu0 0.0
        %1434 = vmatpush.msra.mxu0 0.0
        %1435 = vmatpush.msra.mxu0 0.0
        %1436 = vmatpush.msra.mxu0 0.0
        %1437 = vmatpush.msra.mxu0 0.0
        %1438 = vmatpush.msra.mxu0 %v1396
        %1439 = vmatpush.msra.mxu0 %v1394
        %1440 = vmatmul.f32.gmra.mxu0 %v1402
        %v1441 = vpop.f32.mrf.mxu0
        %v1442 = vadd.f32 0.0, %v1441
        %1443 = vdwg.mxu0
        %v1444 = vadd.f32 %v1377, %v1422
        %v1445 = vadd.f32 %v1378, %v1442
        %1446 = vrot.lane.b32.xlu0 %v1225, 111
        %v1447 = vpop.permute.xlu0 %1446
        %1448 = vrot.lane.b32.xlu0 %v1226, 111
        %v1449 = vpop.permute.xlu0 %1448
        %1450 = vrot.lane.b32.xlu0 %v1227, 111
        %v1451 = vpop.permute.xlu0 %1450
        %1452 = vrot.lane.b32.xlu0 %v1228, 111
        %v1453 = vpop.permute.xlu0 %1452
        %1454 = vrot.lane.b32.xlu0 %v1229, 111
        %v1455 = vpop.permute.xlu0 %1454
        %1456 = vrot.lane.b32.xlu0 %v1230, 111
        %v1457 = vpop.permute.xlu0 %1456
        %v1458 = vsel %vm809, %v1447, %v1449
        %v1459 = vsel %vm809, %v1449, %v1451
        %v1460 = vsel %vm809, %v1453, %v1455
        %v1461 = vsel %vm809, %v1455, %v1457
        %v1466 = vsel %vm380, %v1458, 0.0
        %v1467 = vsel %vm381, %v1459, 0.0
        %v1468 = vsel %vm380, %v1460, 0.0
        %v1469 = vsel %vm381, %v1461, 0.0
        %s1470 = scalar_lea.vmem %s1, 68
        %v1471 = vld [vmem:[%s1470] sm:$0xf]
        %v1473 = vsel %vm265, %v1471, 0
        %1475 = vmatpush.msra.mxu0 0.0
        %1476 = vmatpush.msra.mxu0 0.0
        %1477 = vmatpush.msra.mxu0 0.0
        %1478 = vmatpush.msra.mxu0 0.0
        %1479 = vmatpush.msra.mxu0 0.0
        %1480 = vmatpush.msra.mxu0 0.0
        %1481 = vmatpush.msra.mxu0 0.0
        %1482 = vmatpush.msra.mxu0 0.0
        %1483 = vmatpush.msra.mxu0 0.0
        %1484 = vmatpush.msra.mxu0 0.0
        %1485 = vmatpush.msra.mxu0 0.0
        %1486 = vmatpush.msra.mxu0 0.0
        %1487 = vmatpush.msra.mxu0 0.0
        %1488 = vmatpush.msra.mxu0 0.0
        %1489 = vmatpush.msra.mxu0 %v1468
        %1490 = vmatpush.msra.mxu0 %v1466
        %1491 = vmatmul.f32.gmra.mxu0 %v1473
        %v1492 = vpop.f32.mrf.mxu0
        %v1493 = vadd.f32 0.0, %v1492
        %1494 = vdwg.mxu0
        %1495 = vmatpush.msra.mxu0 0.0
        %1496 = vmatpush.msra.mxu0 0.0
        %1497 = vmatpush.msra.mxu0 0.0
        %1498 = vmatpush.msra.mxu0 0.0
        %1499 = vmatpush.msra.mxu0 0.0
        %1500 = vmatpush.msra.mxu0 0.0
        %1501 = vmatpush.msra.mxu0 0.0
        %1502 = vmatpush.msra.mxu0 0.0
        %1503 = vmatpush.msra.mxu0 0.0
        %1504 = vmatpush.msra.mxu0 0.0
        %1505 = vmatpush.msra.mxu0 0.0
        %1506 = vmatpush.msra.mxu0 0.0
        %1507 = vmatpush.msra.mxu0 0.0
        %1508 = vmatpush.msra.mxu0 0.0
        %1509 = vmatpush.msra.mxu0 %v1469
        %1510 = vmatpush.msra.mxu0 %v1467
        %1511 = vmatmul.f32.gmra.mxu0 %v1473
        %v1512 = vpop.f32.mrf.mxu0
        %v1513 = vadd.f32 0.0, %v1512
        %1514 = vdwg.mxu0
        %v1515 = vadd.f32 %v1444, %v1493
        %v1516 = vadd.f32 %v1445, %v1513
        %v1517 = vmax.f32 %v1515, 0.0
        %v1518 = vmax.f32 %v1516, 0.0
        %1519 = vst [vmem:[#allocation2 + $0x28] sm:$0xf] %v1517
        %1520 = vst [vmem:[#allocation2 + $0x30] sm:$0xf] %v1518
        %s1521 = scalar_lea.vmem %s2, 8
        %v1522 = vld [vmem:[%s1521] sm:$0xf]
        %1524 = vset.pattern.permute.xlu0 0
        %1525 = vperm.xlu0 %1524, %v1522
        %v1526 = vpop.permute.xlu0 %1525
        %v1528 = vld [vmem:[#allocation2] sm:$0xff]
        %v1529 = vld [vmem:[#allocation2 + $0x8] sm:$0xff]
        %v1530 = vld [vmem:[#allocation2 + $0x10] sm:$0xff]
        %v1531 = vld [vmem:[#allocation2 + $0x20] sm:$0xff]
        %v1532 = vld [vmem:[#allocation2 + $0x28] sm:$0xff]
        %v1533 = vld [vmem:[#allocation2 + $0x30] sm:$0xff]
        %1540 = vrot.lane.b32.xlu0 %v1528, 17
        %v1541 = vpop.permute.xlu0 %1540
        %1542 = vrot.lane.b32.xlu0 %v1529, 17
        %v1543 = vpop.permute.xlu0 %1542
        %1544 = vrot.lane.b32.xlu0 %v1530, 17
        %v1545 = vpop.permute.xlu0 %1544
        %1546 = vrot.lane.b32.xlu0 %v1531, 17
        %v1547 = vpop.permute.xlu0 %1546
        %1548 = vrot.lane.b32.xlu0 %v1532, 17
        %v1549 = vpop.permute.xlu0 %1548
        %1550 = vrot.lane.b32.xlu0 %v1533, 17
        %v1551 = vpop.permute.xlu0 %1550
        %v1552 = vsel %vm251, %v1541, %v1543
        %v1553 = vsel %vm251, %v1543, %v1545
        %v1554 = vsel %vm251, %v1547, %v1549
        %v1555 = vsel %vm251, %v1549, %v1551
        %v1560 = vsel %vm231, %v1552, 0.0
        %v1561 = vsel %vm232, %v1553, 0.0
        %v1562 = vsel %vm231, %v1554, 0.0
        %v1563 = vsel %vm232, %v1555, 0.0
        %s1564 = scalar_lea.vmem %s1, 72
        %v1565 = vld [vmem:[%s1564] sm:$0xf]
        %v1567 = vsel %vm265, %v1565, 0
        %1569 = vmatpush.msra.mxu0 0.0
        %1570 = vmatpush.msra.mxu0 0.0
        %1571 = vmatpush.msra.mxu0 0.0
        %1572 = vmatpush.msra.mxu0 0.0
        %1573 = vmatpush.msra.mxu0 0.0
        %1574 = vmatpush.msra.mxu0 0.0
        %1575 = vmatpush.msra.mxu0 0.0
        %1576 = vmatpush.msra.mxu0 0.0
        %1577 = vmatpush.msra.mxu0 0.0
        %1578 = vmatpush.msra.mxu0 0.0
        %1579 = vmatpush.msra.mxu0 0.0
        %1580 = vmatpush.msra.mxu0 0.0
        %1581 = vmatpush.msra.mxu0 0.0
        %1582 = vmatpush.msra.mxu0 0.0
        %1583 = vmatpush.msra.mxu0 %v1562
        %1584 = vmatpush.msra.mxu0 %v1560
        %1585 = vmatmul.f32.gmra.mxu0 %v1567
        %v1586 = vpop.f32.mrf.mxu0
        %v1587 = vadd.f32 0.0, %v1586
        %1588 = vdwg.mxu0
        %1589 = vmatpush.msra.mxu0 0.0
        %1590 = vmatpush.msra.mxu0 0.0
        %1591 = vmatpush.msra.mxu0 0.0
        %1592 = vmatpush.msra.mxu0 0.0
        %1593 = vmatpush.msra.mxu0 0.0
        %1594 = vmatpush.msra.mxu0 0.0
        %1595 = vmatpush.msra.mxu0 0.0
        %1596 = vmatpush.msra.mxu0 0.0
        %1597 = vmatpush.msra.mxu0 0.0
        %1598 = vmatpush.msra.mxu0 0.0
        %1599 = vmatpush.msra.mxu0 0.0
        %1600 = vmatpush.msra.mxu0 0.0
        %1601 = vmatpush.msra.mxu0 0.0
        %1602 = vmatpush.msra.mxu0 0.0
        %1603 = vmatpush.msra.mxu0 %v1563
        %1604 = vmatpush.msra.mxu0 %v1561
        %1605 = vmatmul.f32.gmra.mxu0 %v1567
        %v1606 = vpop.f32.mrf.mxu0
        %v1607 = vadd.f32 0.0, %v1606
        %1608 = vdwg.mxu0
        %v1609 = vadd.f32 %v1526, %v1587
        %v1610 = vadd.f32 %v1526, %v1607
        %s1611 = scalar_lea.vmem %s1, 76
        %v1612 = vld [vmem:[%s1611] sm:$0xf]
        %1613 = vrot.lane.b32.xlu0 %v1528, 16
        %v1614 = vpop.permute.xlu0 %1613
        %1615 = vrot.lane.b32.xlu0 %v1529, 16
        %v1616 = vpop.permute.xlu0 %1615
        %1617 = vrot.lane.b32.xlu0 %v1530, 16
        %v1618 = vpop.permute.xlu0 %1617
        %1619 = vrot.lane.b32.xlu0 %v1531, 16
        %v1620 = vpop.permute.xlu0 %1619
        %1621 = vrot.lane.b32.xlu0 %v1532, 16
        %v1622 = vpop.permute.xlu0 %1621
        %1623 = vrot.lane.b32.xlu0 %v1533, 16
        %v1624 = vpop.permute.xlu0 %1623
        %v1625 = vsel %vm265, %v1614, %v1616
        %v1626 = vsel %vm265, %v1616, %v1618
        %v1627 = vsel %vm265, %v1620, %v1622
        %v1628 = vsel %vm265, %v1622, %v1624
        %v1634 = vsel %vm265, %v1612, 0
        %1636 = vmatpush.msra.mxu0 0.0
        %1637 = vmatpush.msra.mxu0 0.0
        %1638 = vmatpush.msra.mxu0 0.0
        %1639 = vmatpush.msra.mxu0 0.0
        %1640 = vmatpush.msra.mxu0 0.0
        %1641 = vmatpush.msra.mxu0 0.0
        %1642 = vmatpush.msra.mxu0 0.0
        %1643 = vmatpush.msra.mxu0 0.0
        %1644 = vmatpush.msra.mxu0 0.0
        %1645 = vmatpush.msra.mxu0 0.0
        %1646 = vmatpush.msra.mxu0 0.0
        %1647 = vmatpush.msra.mxu0 0.0
        %1648 = vmatpush.msra.mxu0 0.0
        %1649 = vmatpush.msra.mxu0 0.0
        %1650 = vmatpush.msra.mxu0 %v1627
        %1651 = vmatpush.msra.mxu0 %v1625
        %1652 = vmatmul.f32.gmra.mxu0 %v1634
        %v1653 = vpop.f32.mrf.mxu0
        %v1654 = vadd.f32 0.0, %v1653
        %1655 = vdwg.mxu0
        %1656 = vmatpush.msra.mxu0 0.0
        %1657 = vmatpush.msra.mxu0 0.0
        %1658 = vmatpush.msra.mxu0 0.0
        %1659 = vmatpush.msra.mxu0 0.0
        %1660 = vmatpush.msra.mxu0 0.0
        %1661 = vmatpush.msra.mxu0 0.0
        %1662 = vmatpush.msra.mxu0 0.0
        %1663 = vmatpush.msra.mxu0 0.0
        %1664 = vmatpush.msra.mxu0 0.0
        %1665 = vmatpush.msra.mxu0 0.0
        %1666 = vmatpush.msra.mxu0 0.0
        %1667 = vmatpush.msra.mxu0 0.0
        %1668 = vmatpush.msra.mxu0 0.0
        %1669 = vmatpush.msra.mxu0 0.0
        %1670 = vmatpush.msra.mxu0 %v1628
        %1671 = vmatpush.msra.mxu0 %v1626
        %1672 = vmatmul.f32.gmra.mxu0 %v1634
        %v1673 = vpop.f32.mrf.mxu0
        %v1674 = vadd.f32 0.0, %v1673
        %1675 = vdwg.mxu0
        %v1676 = vadd.f32 %v1609, %v1654
        %v1677 = vadd.f32 %v1610, %v1674
        %1678 = vrot.lane.b32.xlu0 %v1528, 15
        %v1679 = vpop.permute.xlu0 %1678
        %1680 = vrot.lane.b32.xlu0 %v1529, 15
        %v1681 = vpop.permute.xlu0 %1680
        %1682 = vrot.lane.b32.xlu0 %v1530, 15
        %v1683 = vpop.permute.xlu0 %1682
        %1684 = vrot.lane.b32.xlu0 %v1531, 15
        %v1685 = vpop.permute.xlu0 %1684
        %1686 = vrot.lane.b32.xlu0 %v1532, 15
        %v1687 = vpop.permute.xlu0 %1686
        %1688 = vrot.lane.b32.xlu0 %v1533, 15
        %v1689 = vpop.permute.xlu0 %1688
        %v1690 = vsel %vm394, %v1679, %v1681
        %v1691 = vsel %vm394, %v1681, %v1683
        %v1692 = vsel %vm394, %v1685, %v1687
        %v1693 = vsel %vm394, %v1687, %v1689
        %v1698 = vsel %vm380, %v1690, 0.0
        %v1699 = vsel %vm381, %v1691, 0.0
        %v1700 = vsel %vm380, %v1692, 0.0
        %v1701 = vsel %vm381, %v1693, 0.0
        %s1702 = scalar_lea.vmem %s1, 80
        %v1703 = vld [vmem:[%s1702] sm:$0xf]
        %v1705 = vsel %vm265, %v1703, 0
        %1707 = vmatpush.msra.mxu0 0.0
        %1708 = vmatpush.msra.mxu0 0.0
        %1709 = vmatpush.msra.mxu0 0.0
        %1710 = vmatpush.msra.mxu0 0.0
        %1711 = vmatpush.msra.mxu0 0.0
        %1712 = vmatpush.msra.mxu0 0.0
        %1713 = vmatpush.msra.mxu0 0.0
        %1714 = vmatpush.msra.mxu0 0.0
        %1715 = vmatpush.msra.mxu0 0.0
        %1716 = vmatpush.msra.mxu0 0.0
        %1717 = vmatpush.msra.mxu0 0.0
        %1718 = vmatpush.msra.mxu0 0.0
        %1719 = vmatpush.msra.mxu0 0.0
        %1720 = vmatpush.msra.mxu0 0.0
        %1721 = vmatpush.msra.mxu0 %v1700
        %1722 = vmatpush.msra.mxu0 %v1698
        %1723 = vmatmul.f32.gmra.mxu0 %v1705
        %v1724 = vpop.f32.mrf.mxu0
        %v1725 = vadd.f32 0.0, %v1724
        %1726 = vdwg.mxu0
        %1727 = vmatpush.msra.mxu0 0.0
        %1728 = vmatpush.msra.mxu0 0.0
        %1729 = vmatpush.msra.mxu0 0.0
        %1730 = vmatpush.msra.mxu0 0.0
        %1731 = vmatpush.msra.mxu0 0.0
        %1732 = vmatpush.msra.mxu0 0.0
        %1733 = vmatpush.msra.mxu0 0.0
        %1734 = vmatpush.msra.mxu0 0.0
        %1735 = vmatpush.msra.mxu0 0.0
        %1736 = vmatpush.msra.mxu0 0.0
        %1737 = vmatpush.msra.mxu0 0.0
        %1738 = vmatpush.msra.mxu0 0.0
        %1739 = vmatpush.msra.mxu0 0.0
        %1740 = vmatpush.msra.mxu0 0.0
        %1741 = vmatpush.msra.mxu0 %v1701
        %1742 = vmatpush.msra.mxu0 %v1699
        %1743 = vmatmul.f32.gmra.mxu0 %v1705
        %v1744 = vpop.f32.mrf.mxu0
        %v1745 = vadd.f32 0.0, %v1744
        %1746 = vdwg.mxu0
        %v1747 = vadd.f32 %v1676, %v1725
        %v1748 = vadd.f32 %v1677, %v1745
        %1749 = vrot.lane.b32.xlu0 %v1528, 1
        %v1750 = vpop.permute.xlu0 %1749
        %1751 = vrot.lane.b32.xlu0 %v1529, 1
        %v1752 = vpop.permute.xlu0 %1751
        %1753 = vrot.lane.b32.xlu0 %v1530, 1
        %v1754 = vpop.permute.xlu0 %1753
        %1755 = vrot.lane.b32.xlu0 %v1531, 1
        %v1756 = vpop.permute.xlu0 %1755
        %1757 = vrot.lane.b32.xlu0 %v1532, 1
        %v1758 = vpop.permute.xlu0 %1757
        %1759 = vrot.lane.b32.xlu0 %v1533, 1
        %v1760 = vpop.permute.xlu0 %1759
        %v1761 = vsel %vm466, %v1750, %v1752
        %v1762 = vsel %vm466, %v1752, %v1754
        %v1763 = vsel %vm466, %v1756, %v1758
        %v1764 = vsel %vm466, %v1758, %v1760
        %v1769 = vsel %vm231, %v1761, 0.0
        %v1770 = vsel %vm232, %v1762, 0.0
        %v1771 = vsel %vm231, %v1763, 0.0
        %v1772 = vsel %vm232, %v1764, 0.0
        %s1773 = scalar_lea.vmem %s1, 84
        %v1774 = vld [vmem:[%s1773] sm:$0xf]
        %v1776 = vsel %vm265, %v1774, 0
        %1778 = vmatpush.msra.mxu0 0.0
        %1779 = vmatpush.msra.mxu0 0.0
        %1780 = vmatpush.msra.mxu0 0.0
        %1781 = vmatpush.msra.mxu0 0.0
        %1782 = vmatpush.msra.mxu0 0.0
        %1783 = vmatpush.msra.mxu0 0.0
        %1784 = vmatpush.msra.mxu0 0.0
        %1785 = vmatpush.msra.mxu0 0.0
        %1786 = vmatpush.msra.mxu0 0.0
        %1787 = vmatpush.msra.mxu0 0.0
        %1788 = vmatpush.msra.mxu0 0.0
        %1789 = vmatpush.msra.mxu0 0.0
        %1790 = vmatpush.msra.mxu0 0.0
        %1791 = vmatpush.msra.mxu0 0.0
        %1792 = vmatpush.msra.mxu0 %v1771
        %1793 = vmatpush.msra.mxu0 %v1769
        %1794 = vmatmul.f32.gmra.mxu0 %v1776
        %v1795 = vpop.f32.mrf.mxu0
        %v1796 = vadd.f32 0.0, %v1795
        %1797 = vdwg.mxu0
        %1798 = vmatpush.msra.mxu0 0.0
        %1799 = vmatpush.msra.mxu0 0.0
        %1800 = vmatpush.msra.mxu0 0.0
        %1801 = vmatpush.msra.mxu0 0.0
        %1802 = vmatpush.msra.mxu0 0.0
        %1803 = vmatpush.msra.mxu0 0.0
        %1804 = vmatpush.msra.mxu0 0.0
        %1805 = vmatpush.msra.mxu0 0.0
        %1806 = vmatpush.msra.mxu0 0.0
        %1807 = vmatpush.msra.mxu0 0.0
        %1808 = vmatpush.msra.mxu0 0.0
        %1809 = vmatpush.msra.mxu0 0.0
        %1810 = vmatpush.msra.mxu0 0.0
        %1811 = vmatpush.msra.mxu0 0.0
        %1812 = vmatpush.msra.mxu0 %v1772
        %1813 = vmatpush.msra.mxu0 %v1770
        %1814 = vmatmul.f32.gmra.mxu0 %v1776
        %v1815 = vpop.f32.mrf.mxu0
        %v1816 = vadd.f32 0.0, %v1815
        %1817 = vdwg.mxu0
        %v1818 = vadd.f32 %v1747, %v1796
        %v1819 = vadd.f32 %v1748, %v1816
        %s1820 = scalar_lea.vmem %s1, 88
        %v1821 = vld [vmem:[%s1820] sm:$0xf]
        %v1823 = vsel %vm265, %v1821, 0
        %1825 = vmatpush.msra.mxu0 0.0
        %1826 = vmatpush.msra.mxu0 0.0
        %1827 = vmatpush.msra.mxu0 0.0
        %1828 = vmatpush.msra.mxu0 0.0
        %1829 = vmatpush.msra.mxu0 0.0
        %1830 = vmatpush.msra.mxu0 0.0
        %1831 = vmatpush.msra.mxu0 0.0
        %1832 = vmatpush.msra.mxu0 0.0
        %1833 = vmatpush.msra.mxu0 0.0
        %1834 = vmatpush.msra.mxu0 0.0
        %1835 = vmatpush.msra.mxu0 0.0
        %1836 = vmatpush.msra.mxu0 0.0
        %1837 = vmatpush.msra.mxu0 0.0
        %1838 = vmatpush.msra.mxu0 0.0
        %1839 = vmatpush.msra.mxu0 %v1532
        %1840 = vmatpush.msra.mxu0 %v1529
        %1841 = vmatmul.f32.gmra.mxu0 %v1823
        %v1842 = vpop.f32.mrf.mxu0
        %v1843 = vadd.f32 0.0, %v1842
        %1844 = vdwg.mxu0
        %1845 = vmatpush.msra.mxu0 0.0
        %1846 = vmatpush.msra.mxu0 0.0
        %1847 = vmatpush.msra.mxu0 0.0
        %1848 = vmatpush.msra.mxu0 0.0
        %1849 = vmatpush.msra.mxu0 0.0
        %1850 = vmatpush.msra.mxu0 0.0
        %1851 = vmatpush.msra.mxu0 0.0
        %1852 = vmatpush.msra.mxu0 0.0
        %1853 = vmatpush.msra.mxu0 0.0
        %1854 = vmatpush.msra.mxu0 0.0
        %1855 = vmatpush.msra.mxu0 0.0
        %1856 = vmatpush.msra.mxu0 0.0
        %1857 = vmatpush.msra.mxu0 0.0
        %1858 = vmatpush.msra.mxu0 0.0
        %1859 = vmatpush.msra.mxu0 %v1533
        %1860 = vmatpush.msra.mxu0 %v1530
        %1861 = vmatmul.f32.gmra.mxu0 %v1823
        %v1862 = vpop.f32.mrf.mxu0
        %v1863 = vadd.f32 0.0, %v1862
        %1864 = vdwg.mxu0
        %v1865 = vadd.f32 %v1818, %v1843
        %v1866 = vadd.f32 %v1819, %v1863
        %v1867 = vld [vmem:[#allocation2 + $0x8] sm:$0xff]
        %v1868 = vld [vmem:[#allocation2 + $0x10] sm:$0xff]
        %v1869 = vld [vmem:[#allocation2 + $0x18] sm:$0xff]
        %v1870 = vld [vmem:[#allocation2 + $0x28] sm:$0xff]
        %v1871 = vld [vmem:[#allocation2 + $0x30] sm:$0xff]
        %v1872 = vld [vmem:[#allocation2 + $0x38] sm:$0xff]
        %1879 = vrot.lane.b32.xlu0 %v1867, 127
        %v1880 = vpop.permute.xlu0 %1879
        %1881 = vrot.lane.b32.xlu0 %v1868, 127
        %v1882 = vpop.permute.xlu0 %1881
        %1883 = vrot.lane.b32.xlu0 %v1869, 127
        %v1884 = vpop.permute.xlu0 %1883
        %1885 = vrot.lane.b32.xlu0 %v1870, 127
        %v1886 = vpop.permute.xlu0 %1885
        %1887 = vrot.lane.b32.xlu0 %v1871, 127
        %v1888 = vpop.permute.xlu0 %1887
        %1889 = vrot.lane.b32.xlu0 %v1872, 127
        %v1890 = vpop.permute.xlu0 %1889
        %v1891 = vsel %vm597, %v1880, %v1882
        %v1892 = vsel %vm597, %v1882, %v1884
        %v1893 = vsel %vm597, %v1886, %v1888
        %v1894 = vsel %vm597, %v1888, %v1890
        %v1899 = vsel %vm380, %v1891, 0.0
        %v1900 = vsel %vm381, %v1892, 0.0
        %v1901 = vsel %vm380, %v1893, 0.0
        %v1902 = vsel %vm381, %v1894, 0.0
        %s1903 = scalar_lea.vmem %s1, 92
        %v1904 = vld [vmem:[%s1903] sm:$0xf]
        %v1906 = vsel %vm265, %v1904, 0
        %1908 = vmatpush.msra.mxu0 0.0
        %1909 = vmatpush.msra.mxu0 0.0
        %1910 = vmatpush.msra.mxu0 0.0
        %1911 = vmatpush.msra.mxu0 0.0
        %1912 = vmatpush.msra.mxu0 0.0
        %1913 = vmatpush.msra.mxu0 0.0
        %1914 = vmatpush.msra.mxu0 0.0
        %1915 = vmatpush.msra.mxu0 0.0
        %1916 = vmatpush.msra.mxu0 0.0
        %1917 = vmatpush.msra.mxu0 0.0
        %1918 = vmatpush.msra.mxu0 0.0
        %1919 = vmatpush.msra.mxu0 0.0
        %1920 = vmatpush.msra.mxu0 0.0
        %1921 = vmatpush.msra.mxu0 0.0
        %1922 = vmatpush.msra.mxu0 %v1901
        %1923 = vmatpush.msra.mxu0 %v1899
        %1924 = vmatmul.f32.gmra.mxu0 %v1906
        %v1925 = vpop.f32.mrf.mxu0
        %v1926 = vadd.f32 0.0, %v1925
        %1927 = vdwg.mxu0
        %1928 = vmatpush.msra.mxu0 0.0
        %1929 = vmatpush.msra.mxu0 0.0
        %1930 = vmatpush.msra.mxu0 0.0
        %1931 = vmatpush.msra.mxu0 0.0
        %1932 = vmatpush.msra.mxu0 0.0
        %1933 = vmatpush.msra.mxu0 0.0
        %1934 = vmatpush.msra.mxu0 0.0
        %1935 = vmatpush.msra.mxu0 0.0
        %1936 = vmatpush.msra.mxu0 0.0
        %1937 = vmatpush.msra.mxu0 0.0
        %1938 = vmatpush.msra.mxu0 0.0
        %1939 = vmatpush.msra.mxu0 0.0
        %1940 = vmatpush.msra.mxu0 0.0
        %1941 = vmatpush.msra.mxu0 0.0
        %1942 = vmatpush.msra.mxu0 %v1902
        %1943 = vmatpush.msra.mxu0 %v1900
        %1944 = vmatmul.f32.gmra.mxu0 %v1906
        %v1945 = vpop.f32.mrf.mxu0
        %v1946 = vadd.f32 0.0, %v1945
        %1947 = vdwg.mxu0
        %v1948 = vadd.f32 %v1865, %v1926
        %v1949 = vadd.f32 %v1866, %v1946
        %1950 = vrot.lane.b32.xlu0 %v1867, 113
        %v1951 = vpop.permute.xlu0 %1950
        %1952 = vrot.lane.b32.xlu0 %v1868, 113
        %v1953 = vpop.permute.xlu0 %1952
        %1954 = vrot.lane.b32.xlu0 %v1869, 113
        %v1955 = vpop.permute.xlu0 %1954
        %1956 = vrot.lane.b32.xlu0 %v1870, 113
        %v1957 = vpop.permute.xlu0 %1956
        %1958 = vrot.lane.b32.xlu0 %v1871, 113
        %v1959 = vpop.permute.xlu0 %1958
        %1960 = vrot.lane.b32.xlu0 %v1872, 113
        %v1961 = vpop.permute.xlu0 %1960
        %v1962 = vsel %vm669, %v1951, %v1953
        %v1963 = vsel %vm669, %v1953, %v1955
        %v1964 = vsel %vm669, %v1957, %v1959
        %v1965 = vsel %vm669, %v1959, %v1961
        %v1970 = vsel %vm231, %v1962, 0.0
        %v1971 = vsel %vm232, %v1963, 0.0
        %v1972 = vsel %vm231, %v1964, 0.0
        %v1973 = vsel %vm232, %v1965, 0.0
        %s1974 = scalar_lea.vmem %s1, 96
        %v1975 = vld [vmem:[%s1974] sm:$0xf]
        %v1977 = vsel %vm265, %v1975, 0
        %1979 = vmatpush.msra.mxu0 0.0
        %1980 = vmatpush.msra.mxu0 0.0
        %1981 = vmatpush.msra.mxu0 0.0
        %1982 = vmatpush.msra.mxu0 0.0
        %1983 = vmatpush.msra.mxu0 0.0
        %1984 = vmatpush.msra.mxu0 0.0
        %1985 = vmatpush.msra.mxu0 0.0
        %1986 = vmatpush.msra.mxu0 0.0
        %1987 = vmatpush.msra.mxu0 0.0
        %1988 = vmatpush.msra.mxu0 0.0
        %1989 = vmatpush.msra.mxu0 0.0
        %1990 = vmatpush.msra.mxu0 0.0
        %1991 = vmatpush.msra.mxu0 0.0
        %1992 = vmatpush.msra.mxu0 0.0
        %1993 = vmatpush.msra.mxu0 %v1972
        %1994 = vmatpush.msra.mxu0 %v1970
        %1995 = vmatmul.f32.gmra.mxu0 %v1977
        %v1996 = vpop.f32.mrf.mxu0
        %v1997 = vadd.f32 0.0, %v1996
        %1998 = vdwg.mxu0
        %1999 = vmatpush.msra.mxu0 0.0
        %2000 = vmatpush.msra.mxu0 0.0
        %2001 = vmatpush.msra.mxu0 0.0
        %2002 = vmatpush.msra.mxu0 0.0
        %2003 = vmatpush.msra.mxu0 0.0
        %2004 = vmatpush.msra.mxu0 0.0
        %2005 = vmatpush.msra.mxu0 0.0
        %2006 = vmatpush.msra.mxu0 0.0
        %2007 = vmatpush.msra.mxu0 0.0
        %2008 = vmatpush.msra.mxu0 0.0
        %2009 = vmatpush.msra.mxu0 0.0
        %2010 = vmatpush.msra.mxu0 0.0
        %2011 = vmatpush.msra.mxu0 0.0
        %2012 = vmatpush.msra.mxu0 0.0
        %2013 = vmatpush.msra.mxu0 %v1973
        %2014 = vmatpush.msra.mxu0 %v1971
        %2015 = vmatmul.f32.gmra.mxu0 %v1977
        %v2016 = vpop.f32.mrf.mxu0
        %v2017 = vadd.f32 0.0, %v2016
        %2018 = vdwg.mxu0
        %v2019 = vadd.f32 %v1948, %v1997
        %v2020 = vadd.f32 %v1949, %v2017
        %s2021 = scalar_lea.vmem %s1, 100
        %v2022 = vld [vmem:[%s2021] sm:$0xf]
        %2023 = vrot.lane.b32.xlu0 %v1867, 112
        %v2024 = vpop.permute.xlu0 %2023
        %2025 = vrot.lane.b32.xlu0 %v1868, 112
        %v2026 = vpop.permute.xlu0 %2025
        %2027 = vrot.lane.b32.xlu0 %v1869, 112
        %v2028 = vpop.permute.xlu0 %2027
        %2029 = vrot.lane.b32.xlu0 %v1870, 112
        %v2030 = vpop.permute.xlu0 %2029
        %2031 = vrot.lane.b32.xlu0 %v1871, 112
        %v2032 = vpop.permute.xlu0 %2031
        %2033 = vrot.lane.b32.xlu0 %v1872, 112
        %v2034 = vpop.permute.xlu0 %2033
        %v2035 = vsel %vm743, %v2024, %v2026
        %v2036 = vsel %vm743, %v2026, %v2028
        %v2037 = vsel %vm743, %v2030, %v2032
        %v2038 = vsel %vm743, %v2032, %v2034
        %v2044 = vsel %vm265, %v2022, 0
        %2046 = vmatpush.msra.mxu0 0.0
        %2047 = vmatpush.msra.mxu0 0.0
        %2048 = vmatpush.msra.mxu0 0.0
        %2049 = vmatpush.msra.mxu0 0.0
        %2050 = vmatpush.msra.mxu0 0.0
        %2051 = vmatpush.msra.mxu0 0.0
        %2052 = vmatpush.msra.mxu0 0.0
        %2053 = vmatpush.msra.mxu0 0.0
        %2054 = vmatpush.msra.mxu0 0.0
        %2055 = vmatpush.msra.mxu0 0.0
        %2056 = vmatpush.msra.mxu0 0.0
        %2057 = vmatpush.msra.mxu0 0.0
        %2058 = vmatpush.msra.mxu0 0.0
        %2059 = vmatpush.msra.mxu0 0.0
        %2060 = vmatpush.msra.mxu0 %v2037
        %2061 = vmatpush.msra.mxu0 %v2035
        %2062 = vmatmul.f32.gmra.mxu0 %v2044
        %v2063 = vpop.f32.mrf.mxu0
        %v2064 = vadd.f32 0.0, %v2063
        %2065 = vdwg.mxu0
        %2066 = vmatpush.msra.mxu0 0.0
        %2067 = vmatpush.msra.mxu0 0.0
        %2068 = vmatpush.msra.mxu0 0.0
        %2069 = vmatpush.msra.mxu0 0.0
        %2070 = vmatpush.msra.mxu0 0.0
        %2071 = vmatpush.msra.mxu0 0.0
        %2072 = vmatpush.msra.mxu0 0.0
        %2073 = vmatpush.msra.mxu0 0.0
        %2074 = vmatpush.msra.mxu0 0.0
        %2075 = vmatpush.msra.mxu0 0.0
        %2076 = vmatpush.msra.mxu0 0.0
        %2077 = vmatpush.msra.mxu0 0.0
        %2078 = vmatpush.msra.mxu0 0.0
        %2079 = vmatpush.msra.mxu0 0.0
        %2080 = vmatpush.msra.mxu0 %v2038
        %2081 = vmatpush.msra.mxu0 %v2036
        %2082 = vmatmul.f32.gmra.mxu0 %v2044
        %v2083 = vpop.f32.mrf.mxu0
        %v2084 = vadd.f32 0.0, %v2083
        %2085 = vdwg.mxu0
        %v2086 = vadd.f32 %v2019, %v2064
        %v2087 = vadd.f32 %v2020, %v2084
        %2088 = vrot.lane.b32.xlu0 %v1867, 111
        %v2089 = vpop.permute.xlu0 %2088
        %2090 = vrot.lane.b32.xlu0 %v1868, 111
        %v2091 = vpop.permute.xlu0 %2090
        %2092 = vrot.lane.b32.xlu0 %v1869, 111
        %v2093 = vpop.permute.xlu0 %2092
        %2094 = vrot.lane.b32.xlu0 %v1870, 111
        %v2095 = vpop.permute.xlu0 %2094
        %2096 = vrot.lane.b32.xlu0 %v1871, 111
        %v2097 = vpop.permute.xlu0 %2096
        %2098 = vrot.lane.b32.xlu0 %v1872, 111
        %v2099 = vpop.permute.xlu0 %2098
        %v2100 = vsel %vm809, %v2089, %v2091
        %v2101 = vsel %vm809, %v2091, %v2093
        %v2102 = vsel %vm809, %v2095, %v2097
        %v2103 = vsel %vm809, %v2097, %v2099
        %v2108 = vsel %vm380, %v2100, 0.0
        %v2109 = vsel %vm381, %v2101, 0.0
        %v2110 = vsel %vm380, %v2102, 0.0
        %v2111 = vsel %vm381, %v2103, 0.0
        %s2112 = scalar_lea.vmem %s1, 104
        %v2113 = vld [vmem:[%s2112] sm:$0xf]
        %v2115 = vsel %vm265, %v2113, 0
        %2117 = vmatpush.msra.mxu0 0.0
        %2118 = vmatpush.msra.mxu0 0.0
        %2119 = vmatpush.msra.mxu0 0.0
        %2120 = vmatpush.msra.mxu0 0.0
        %2121 = vmatpush.msra.mxu0 0.0
        %2122 = vmatpush.msra.mxu0 0.0
        %2123 = vmatpush.msra.mxu0 0.0
        %2124 = vmatpush.msra.mxu0 0.0
        %2125 = vmatpush.msra.mxu0 0.0
        %2126 = vmatpush.msra.mxu0 0.0
        %2127 = vmatpush.msra.mxu0 0.0
        %2128 = vmatpush.msra.mxu0 0.0
        %2129 = vmatpush.msra.mxu0 0.0
        %2130 = vmatpush.msra.mxu0 0.0
        %2131 = vmatpush.msra.mxu0 %v2110
        %2132 = vmatpush.msra.mxu0 %v2108
        %2133 = vmatmul.f32.gmra.mxu0 %v2115
        %v2134 = vpop.f32.mrf.mxu0
        %v2135 = vadd.f32 0.0, %v2134
        %2136 = vdwg.mxu0
        %2137 = vmatpush.msra.mxu0 0.0
        %2138 = vmatpush.msra.mxu0 0.0
        %2139 = vmatpush.msra.mxu0 0.0
        %2140 = vmatpush.msra.mxu0 0.0
        %2141 = vmatpush.msra.mxu0 0.0
        %2142 = vmatpush.msra.mxu0 0.0
        %2143 = vmatpush.msra.mxu0 0.0
        %2144 = vmatpush.msra.mxu0 0.0
        %2145 = vmatpush.msra.mxu0 0.0
        %2146 = vmatpush.msra.mxu0 0.0
        %2147 = vmatpush.msra.mxu0 0.0
        %2148 = vmatpush.msra.mxu0 0.0
        %2149 = vmatpush.msra.mxu0 0.0
        %2150 = vmatpush.msra.mxu0 0.0
        %2151 = vmatpush.msra.mxu0 %v2111
        %2152 = vmatpush.msra.mxu0 %v2109
        %2153 = vmatmul.f32.gmra.mxu0 %v2115
        %v2154 = vpop.f32.mrf.mxu0
        %v2155 = vadd.f32 0.0, %v2154
        %2156 = vdwg.mxu0
        %v2157 = vadd.f32 %v2086, %v2135
        %v2158 = vadd.f32 %v2087, %v2155
        %v2159 = vmax.f32 %v2157, 0.0
        %v2160 = vmax.f32 %v2158, 0.0
        %v2163 = vrot.slane %v2159, 4
        %v2164 = vrot.slane %v2160, 4
        %2167 = vst [vmem:[#allocation2 + $0x28] sm:$0xf0] %v2163
        %2168 = vst [vmem:[#allocation2 + $0x30] sm:$0xf0] %v2164
        %v2169 = vld [vmem:[#allocation2 + $0x8] sm:$0xff]
        %v2170 = vld [vmem:[#allocation2 + $0x10] sm:$0xff]
        %v2171 = vld [vmem:[#allocation2 + $0x28] sm:$0xff]
        %v2172 = vld [vmem:[#allocation2 + $0x30] sm:$0xff]
        %2173 = vst [vmem:[%s163] sm:$0xff] %v2169
        %2174 = vst [vmem:[%s163 + $0x8] sm:$0xff] %v2170
        %2175 = vst [vmem:[%s163 + $0x10] sm:$0xff] %v2171
        %2176 = vst [vmem:[%s163 + $0x18] sm:$0xff] %v2172
        %s2177 = sand.u32 %s93, 1
        %s2178 = scalar_lea.sflag [#allocation4], %s2177
        %s2179 = sand.u32 %s93, 1
        %s2180 = smul.addr %s2179, 32
        %s2181 = scalar_lea.vmem [#allocation3], %s2180
        // Predicated region
        $region33: #{tpu_custom_call.1} parent=31 // pred_check
          %p2182 = pneg %p103
        $region34: #{tpu_custom_call.1} parent=31 // pred_check_branch
          %2184 = sbr.rel (%p2182) target = $region36
        $region35: #{tpu_custom_call.1} parent=31 // pred_region
          %2186 = vsyncadd %s2178, 0
          %s2187 = smul.addr %s17, 4
          %s2188 = smul.addr %s2187, 8
          %s2189 = scalar_lea.hbm %s3, %s2188
          %s2190 = sshll.u32 %s2181, 4
          %s2191 = int_to_ptr.vmem [resolvable:$true] %s2190
          %s2192 = sshll.u32 %s2189, 4
          %s2193 = int_to_ptr.hbm [resolvable:$true] %s2192
          %2198 = dma.vmem_to_hbm [thread:$0]  %s2191, 512, %s2193, %s2178, 256, 256, 16
        $region36: #{tpu_custom_call.1} parent=31 // pred_fallthru
          _
      $region32: #{tpu_custom_call.1} parent=5 // pred_fallthru
        _
      %p2199 = scmp.le.s32.totalorder 2, %s12
      // Predicated region
      $region37: #{tpu_custom_call.1} parent=5 // pred_check
        %p2200 = pneg %p2199
      $region38: #{tpu_custom_call.1} parent=5 // pred_check_branch
        %2202 = sbr.rel (%p2200) target = $region40
      $region39: #{tpu_custom_call.1} parent=5 // pred_region
        %s2203 = ssub.s32 %s12, 2
        // Predicated region
        $region41: #{tpu_custom_call.1} parent=39 // pred_check
          %p2204 = pneg %p109
        $region42: #{tpu_custom_call.1} parent=39 // pred_check_branch
          %2206 = sbr.rel (%p2204) target = $region44
        $region43: #{tpu_custom_call.1} parent=39 // pred_region
          %s2207 = sand.u32 %s94, 1
          %s2208 = scalar_lea.sflag [#allocation4], %s2207
          %s2209 = sand.u32 %s94, 1
          %s2210 = smul.addr %s2209, 32
          %s2211 = scalar_lea.vmem [#allocation3], %s2210
          %2213 = dma.done %s2208, 512
        $region44: #{tpu_custom_call.1} parent=39 // pred_fallthru
          _
      $region40: #{tpu_custom_call.1} parent=5 // pred_fallthru
        _
    $region6: #{tpu_custom_call.1} parent=1 // loop_footer
      %s16 = sadd.s32 1, %s12
    $region7: #{tpu_custom_call.1} parent=1 // loop_footer_branch
      %11 = sbr.rel target = $region3
    $region8: #{tpu_custom_call.1} parent=1 // loop_exit
      _
    %2214 = vsyncpa [#allocation4], 1
    %s2215 = scalar_lea.sflag [#allocation4], 1
    %2216 = vsyncpa %s2215, 1

</llo_original>
